<compile_context>
chip_gen: v5e
topology: v5e:2x2
jax: 0.10.0
libtpu: 0.0.40
codegen_flags: <defaults>
</compile_context>

<pallas_src>
import math

import jax
import jax.numpy as jnp
from jax import lax
from jax.experimental import pallas as pl
from jax.experimental.pallas import tpu as pltpu

# ----- hyperparameters (the `args` of the PyTorch script) -----
D_MODEL = 32
HEADS = 4
D_K = D_MODEL // HEADS
D_FF = 64
HIDDEN = 32           # LSTM hidden_size
INPUT_SIZE = D_MODEL  # LSTM input_size (LSTM2 consumes encoder output, so == d_model)
BATCH = 2
SEQ_E = 8
SEQ_W = 8
EPS = 1e-6

# ----- weight-slab layout (rows x 256 lanes, f32) -----
SLAB_COLS = 256
R_WIH1 = 0      # (32, 256)  LSTM1 W_ih in fused gate columns
R_WIH2 = 32     # (32, 256)  LSTM2 W_ih in fused gate columns
R_WHH = 64      # (64, 256)  block-diagonal fused W_hh for packed [h1|h2]
R_G1 = 128      # rows 128:160  qkv_w @[0:96],  ff_w1 @[128:192]
R_G2 = 160      # rows 160:192  o_w   @[0:32],  fc1_w @[128:192]
R_G3 = 192      # rows 192:256  ff_w2 @[0:32],  fc2_w @[128:129]
R_BA = 256      # row: qkv_b @[0:96], ff_b1 @[128:192]
R_BB = 264      # row: o_b @[0:32], norm_a @[32:64], norm_b @[64:96], fc2_b @[96:97],
                #      fc1_b @[128:192], ff_b2 @[192:224]
R_BL = 272      # row: fused LSTM bias @[0:256]
SLAB_ROWS = 280


# =============================== fused kernel ===============================

def fused_forward_kernel(x_ref, wemb_ref, w_ref, out_ref):
    # x_ref:    (B*S, D)  encoder input, TIME-major rows (t*B + b)
    # wemb_ref: (T*B, I)  word embeddings, TIME-major rows
    # w_ref:    (SLAB_ROWS, 256) packed parameters
    # out_ref:  (B, 1)
    BS = x_ref.shape[0]
    D = x_ref.shape[1]
    B = out_ref.shape[0]
    S = BS // B
    H = HIDDEN
    scale = 1.0 / math.sqrt(D_K)

    w = w_ref

    # ---- parameter views (single slab, static slices) ----
    qkv_w = w[R_G1:R_G1 + D, 0:3 * D]
    ff_w1 = w[R_G1:R_G1 + D, 128:128 + D_FF]
    o_w = w[R_G2:R_G2 + D, 0:D]
    fc1_w = w[R_G2:R_G2 + H, 128:128 + 2 * H]
    ff_w2 = w[R_G3:R_G3 + D_FF, 0:D]
    fc2_w = w[R_G3:R_G3 + 2 * H, 128:129]
    qkv_b = w[R_BA:R_BA + 1, 0:3 * D]
    ff_b1 = w[R_BA:R_BA + 1, 128:128 + D_FF]
    o_b = w[R_BB:R_BB + 1, 0:D]
    n_a = w[R_BB:R_BB + 1, D:2 * D]
    n_b = w[R_BB:R_BB + 1, 2 * D:3 * D]
    fc2_b = w[R_BB:R_BB + 1, 96:97]
    fc1_b = w[R_BB:R_BB + 1, 128:128 + 2 * H]
    ff_b2 = w[R_BB:R_BB + 1, 192:192 + D]
    wih1 = w[R_WIH1:R_WIH1 + D, :]
    wih2 = w[R_WIH2:R_WIH2 + D, :]
    whh = w[R_WHH:R_WHH + 2 * H, :]
    lstm_b = w[R_BL:R_BL + 1, :]

    x = x_ref[...]                                       # (BS, D) time-major

    # ---- fused Q|K|V projection (encoder W_{q,k,v} folded into MHA linears) ----
    qkv = jnp.dot(x, qkv_w, preferred_element_type=jnp.float32) + qkv_b
    q = qkv[:, 0:D]
    k = qkv[:, D:2 * D]
    v = qkv[:, 2 * D:3 * D]

    # ---- attention (NO softmax / dropout, faithful to the reference) ----
    # Rows are time-major, so same-batch pairs satisfy row%B == col%B: one
    # stripe mask (with 1/sqrt(d_k) folded in) replaces per-batch row slicing.
    ri = lax.broadcasted_iota(jnp.int32, (BS, BS), 0)
    ci = lax.broadcasted_iota(jnp.int32, (BS, BS), 1)
    amask = jnp.where((ri % B) == (ci % B), jnp.float32(scale), jnp.float32(0.0))

    head_outs = []
    for hh in range(HEADS):
        cs = slice(hh * D_K, (hh + 1) * D_K)
        q_h, k_h, v_h = q[:, cs], k[:, cs], v[:, cs]
        s_h = lax.dot_general(q_h, k_h, (((1,), (1,)), ((), ())),
                              preferred_element_type=jnp.float32) * amask
        head_outs.append(jnp.dot(s_h, v_h, preferred_element_type=jnp.float32))
    concat = jnp.concatenate(head_outs, axis=1)          # (BS, D)

    mha_out = jnp.dot(concat, o_w, preferred_element_type=jnp.float32) + o_b
    x_atten = x + mha_out

    # ---- Norm (torch.std is unbiased -> divide by n-1) ----
    mean = jnp.mean(x_atten, axis=-1, keepdims=True)
    dcen = x_atten - mean
    var = jnp.sum(dcen * dcen, axis=-1, keepdims=True) * (1.0 / (D - 1))
    norms = n_a * dcen / (jnp.sqrt(var) + EPS) + n_b

    # ---- FeedForward (dropout == identity in eval) ----
    hff = jnp.maximum(jnp.dot(x_atten, ff_w1, preferred_element_type=jnp.float32) + ff_b1, 0.0)
    ffo = jnp.dot(hff, ff_w2, preferred_element_type=jnp.float32) + ff_b2
    enc = norms + ffo                                    # (BS, D) time-major

    # ---- both LSTMs, fused; input-gate projections hoisted off the recurrence ----
    # pregates rows are time-major -> the loop reads one contiguous (B, 8H) slab.
    pregates = (jnp.dot(wemb_ref[...], wih1, preferred_element_type=jnp.float32)
                + jnp.dot(enc, wih2, preferred_element_type=jnp.float32)
                + lstm_b)                                # (T*B, 8H)

    # TODO(synk): the PyTorch forward draws random xavier_normal_ (h0, c0) on every
    # call; we use deterministic zeros instead.
    h_st = jnp.zeros((B, 2 * H), jnp.float32)            # packed [h1 | h2]
    c_st = jnp.zeros((B, 2 * H), jnp.float32)            # packed [c1 | c2]
    for t in range(S):                                   # fully unrolled, static indices
        gates = pregates[t * B:(t + 1) * B, :] + jnp.dot(
            h_st, whh, preferred_element_type=jnp.float32)      # (B, 8H)
        sg = jax.nn.sigmoid(gates)                       # whole-vreg transcendentals,
        tg = jnp.tanh(gates)                             # slice AFTER the EUP pass
        i_g = sg[:, 0:2 * H]
        f_g = sg[:, 2 * H:4 * H]
        o_g = sg[:, 4 * H:6 * H]
        g_g = tg[:, 6 * H:8 * H]
        c_st = f_g * c_st + i_g * g_g
        h_st = o_g * jnp.tanh(c_st)

    lstm_out = h_st[:, 0:H] + h_st[:, H:2 * H]           # LSTM1 + LSTM2 last hidden

    # ---- head: sigmoid(fc2(dropout(relu(fc1(x))))) ----
    y = jnp.maximum(jnp.dot(lstm_out, fc1_w, preferred_element_type=jnp.float32) + fc1_b, 0.0)
    y = jnp.dot(y, fc2_w, preferred_element_type=jnp.float32) + fc2_b
    out_ref[...] = jax.nn.sigmoid(y)


# ============================ parameters ============================

def init_params(key):
    ks = list(jax.random.split(key, 32))
    ctr = iter(range(32))

    def nrm(shape, scale):
        return scale * jax.random.normal(ks[next(ctr)], shape, dtype=jnp.float32)

    return {
        # Transformer_Encoder raw projections (torch.randn -> unit normal)
        "W_q": nrm((D_MODEL, D_MODEL), 1.0),
        "W_k": nrm((D_MODEL, D_MODEL), 1.0),
        "W_v": nrm((D_MODEL, D_MODEL), 1.0),
        # MultiHeadAttention linears
        "mha_q_w": nrm((D_MODEL, D_MODEL), 0.1), "mha_q_b": nrm((D_MODEL,), 0.1),
        "mha_k_w": nrm((D_MODEL, D_MODEL), 0.1), "mha_k_b": nrm((D_MODEL,), 0.1),
        "mha_v_w": nrm((D_MODEL, D_MODEL), 0.1), "mha_v_b": nrm((D_MODEL,), 0.1),
        "mha_o_w": nrm((D_MODEL, D_MODEL), 0.1), "mha_o_b": nrm((D_MODEL,), 0.1),
        # Norm
        "norm_alpha": jnp.ones((D_MODEL,), jnp.float32),
        "norm_bias": jnp.zeros((D_MODEL,), jnp.float32),
        # FeedForward
        "ff_w1": nrm((D_MODEL, D_FF), 0.1), "ff_b1": nrm((D_FF,), 0.1),
        "ff_w2": nrm((D_FF, D_MODEL), 0.1), "ff_b2": nrm((D_MODEL,), 0.1),
        # LSTM 1 (word_embeddings) and LSTM 2 (encoder output); bias = b_ih + b_hh folded.
        # Gate column layout here: [i | f | o | g] (random init, so the convention is
        # arbitrary; real PyTorch nn.LSTM uses [i | f | g | o]).
        "lstm1_wih": nrm((INPUT_SIZE, 4 * HIDDEN), 0.1),
        "lstm1_whh": nrm((HIDDEN, 4 * HIDDEN), 0.1),
        "lstm1_b": nrm((4 * HIDDEN,), 0.1),
        "lstm2_wih": nrm((D_MODEL, 4 * HIDDEN), 0.1),
        "lstm2_whh": nrm((HIDDEN, 4 * HIDDEN), 0.1),
        "lstm2_b": nrm((4 * HIDDEN,), 0.1),
        # output head (Model.fc1 / Model.fc2)
        "fc1_w": nrm((HIDDEN, 2 * HIDDEN), 0.1), "fc1_b": nrm((2 * HIDDEN,), 0.1),
        "fc2_w": nrm((2 * HIDDEN, 1), 0.1), "fc2_b": nrm((1,), 0.1),
    }


# ==================== host-side weight folding / slab packing ====================

def _fused_gate_cols(wmat, which):
    """Map a (rows, 4H) [i|f|o|g] gate matrix of LSTM `which` (0 or 1) into the
    fused 8H-column layout [i1 i2 | f1 f2 | o1 o2 | g1 g2]; zeros elsewhere."""
    H = HIDDEN
    out = jnp.zeros((wmat.shape[0], 8 * H), jnp.float32)
    for g in range(4):
        out = out.at[:, (2 * g + which) * H:(2 * g + which + 1) * H].set(
            wmat[:, g * H:(g + 1) * H])
    return out


def pack_params(params):
    hp = jax.lax.Precision.HIGHEST
    D, H = D_MODEL, HIDDEN

    # Fold the encoder's raw W_{q,k,v} into the MHA linears -> one (D, 3D) matmul.
    qkv_w = jnp.concatenate([
        jnp.dot(params["W_q"], params["mha_q_w"], precision=hp),
        jnp.dot(params["W_k"], params["mha_k_w"], precision=hp),
        jnp.dot(params["W_v"], params["mha_v_w"], precision=hp)], axis=1)
    qkv_b = jnp.concatenate([params["mha_q_b"], params["mha_k_b"], params["mha_v_b"]])

    wih1 = _fused_gate_cols(params["lstm1_wih"], 0)                  # (D, 8H)
    wih2 = _fused_gate_cols(params["lstm2_wih"], 1)                  # (D, 8H)
    whh = jnp.concatenate([_fused_gate_cols(params["lstm1_whh"], 0),
                           _fused_gate_cols(params["lstm2_whh"], 1)], axis=0)  # (2H, 8H)
    lstm_b = (_fused_gate_cols(params["lstm1_b"].reshape(1, -1), 0)
              + _fused_gate_cols(params["lstm2_b"].reshape(1, -1), 1))         # (1, 8H)

    slab = jnp.zeros((SLAB_ROWS, SLAB_COLS), jnp.float32)
    slab = slab.at[R_WIH1:R_WIH1 + D, :].set(wih1)
    slab = slab.at[R_WIH2:R_WIH2 + D, :].set(wih2)
    slab = slab.at[R_WHH:R_WHH + 2 * H, :].set(whh)
    slab = slab.at[R_G1:R_G1 + D, 0:3 * D].set(qkv_w)
    slab = slab.at[R_G1:R_G1 + D, 128:128 + D_FF].set(params["ff_w1"])
    slab = slab.at[R_G2:R_G2 + D, 0:D].set(params["mha_o_w"])
    slab = slab.at[R_G2:R_G2 + H, 128:128 + 2 * H].set(params["fc1_w"])
    slab = slab.at[R_G3:R_G3 + D_FF, 0:D].set(params["ff_w2"])
    slab = slab.at[R_G3:R_G3 + 2 * H, 128:129].set(params["fc2_w"])
    slab = slab.at[R_BA, 0:3 * D].set(qkv_b)
    slab = slab.at[R_BA, 128:128 + D_FF].set(params["ff_b1"])
    slab = slab.at[R_BB, 0:D].set(params["mha_o_b"])
    slab = slab.at[R_BB, D:2 * D].set(params["norm_alpha"])
    slab = slab.at[R_BB, 2 * D:3 * D].set(params["norm_bias"])
    slab = slab.at[R_BB, 96:97].set(params["fc2_b"])
    slab = slab.at[R_BB, 128:128 + 2 * H].set(params["fc1_b"])
    slab = slab.at[R_BB, 192:192 + D].set(params["ff_b2"])
    slab = slab.at[R_BL:R_BL + 1, :].set(lstm_b)
    return slab


# ============================ forward pass (single fused pallas_call) ============================

@jax.jit
def model_forward(params, embeddings, word_embeddings):
    B, S, D = embeddings.shape
    T = word_embeddings.shape[1]
    assert T == S, "fused LSTM loop assumes equal sequence lengths"

    slab = pack_params(params)

    # Time-major 2-D layouts (row = t*B + b): the whole encoder is row-wise except
    # attention (handled by a stripe mask), and LSTM inputs come out contiguous per step.
    emb_tm = jnp.transpose(embeddings, (1, 0, 2)).reshape(S * B, D)
    wemb_tm = jnp.transpose(word_embeddings, (1, 0, 2)).reshape(T * B, word_embeddings.shape[2])

    return pl.pallas_call(
        fused_forward_kernel,
        out_shape=jax.ShapeDtypeStruct((B, 1), jnp.float32),
        compiler_params=pltpu.CompilerParams(vmem_limit_bytes=16 * 1024 * 1024),
    )(emb_tm, wemb_tm, slab)


# ============================ pure-JAX reference (correctness check) ============================

def reference_forward(params, embeddings, word_embeddings):
    hp = jax.lax.Precision.HIGHEST
    B, S, D = embeddings.shape
    x2 = embeddings.reshape(B * S, D)

    def mm(a, b):
        return jnp.dot(a, b, precision=hp)

    q = mm(mm(x2, params["W_q"]), params["mha_q_w"]) + params["mha_q_b"]
    k = mm(mm(x2, params["W_k"]), params["mha_k_w"]) + params["mha_k_b"]
    v = mm(mm(x2, params["W_v"]), params["mha_v_w"]) + params["mha_v_b"]

    def split(t):
        return t.reshape(B, S, HEADS, D_K).transpose(0, 2, 1, 3)

    qh, kh, vh = split(q), split(k), split(v)
    scores = jnp.einsum('bhqd,bhkd->bhqk', qh, kh, precision=hp) / math.sqrt(D_K)
    attn = jnp.einsum('bhqk,bhkd->bhqd', scores, vh, precision=hp)
    concat = attn.transpose(0, 2, 1, 3).reshape(B * S, D)
    mha_out = mm(concat, params["mha_o_w"]) + params["mha_o_b"]
    x_atten = x2 + mha_out

    mean = jnp.mean(x_atten, -1, keepdims=True)
    dcen = x_atten - mean
    std = jnp.sqrt(jnp.sum(dcen * dcen, -1, keepdims=True) / (D - 1))
    norms = params["norm_alpha"] * dcen / (std + EPS) + params["norm_bias"]
    ff = jnp.maximum(mm(x_atten, params["ff_w1"]) + params["ff_b1"], 0.0)
    ff = mm(ff, params["ff_w2"]) + params["ff_b2"]
    enc = (norms + ff).reshape(B, S, D)

    def lstm(x, wih, whh, b):
        Bx, T, _ = x.shape
        h = jnp.zeros((Bx, HIDDEN), jnp.float32)
        c = jnp.zeros((Bx, HIDDEN), jnp.float32)
        for t in range(T):
            g = mm(x[:, t, :], wih) + mm(h, whh) + b
            sg = jax.nn.sigmoid(g[:, :3 * HIDDEN])
            gg = jnp.tanh(g[:, 3 * HIDDEN:])
            i_g = sg[:, :HIDDEN]
            f_g = sg[:, HIDDEN:2 * HIDDEN]
            o_g = sg[:, 2 * HIDDEN:]
            c = f_g * c + i_g * gg
            h = o_g * jnp.tanh(c)
        return h

    l1 = lstm(word_embeddings, params["lstm1_wih"], params["lstm1_whh"], params["lstm1_b"])
    l2 = lstm(enc, params["lstm2_wih"], params["lstm2_whh"], params["lstm2_b"])
    y = jnp.maximum(mm(l1 + l2, params["fc1_w"]) + params["fc1_b"], 0.0)
    return jax.nn.sigmoid(mm(y, params["fc2_w"]) + params["fc2_b"])


# ================================ main ================================

if __name__ == "__main__":
    key = jax.random.PRNGKey(0)
    kp, ke, kw = jax.random.split(key, 3)
    params = init_params(kp)
    embeddings = jax.random.normal(ke, (BATCH, SEQ_E, D_MODEL), dtype=jnp.float32)
    word_embeddings = jax.random.normal(kw, (BATCH, SEQ_W, INPUT_SIZE), dtype=jnp.float32)

    out = jax.block_until_ready(model_forward(params, embeddings, word_embeddings))
    ref = jax.block_until_ready(reference_forward(params, embeddings, word_embeddings))

    assert out.shape == (BATCH, 1)
    assert bool(jnp.all(jnp.isfinite(out)))
    max_err = float(jnp.max(jnp.abs(out - ref)))
    assert max_err < 1e-2, f"kernel vs reference mismatch: {max_err}"
    print("KERNEL_OK")
</pallas_src>

<mosaic_0001>
module attributes {stable_mosaic.version = 11 : i64} {
  func.func @fused_forward_kernel(%arg0: memref<16x32xf32, #tpu.memory_space<vmem>>, %arg1: memref<16x32xf32, #tpu.memory_space<vmem>>, %arg2: memref<280x256xf32, #tpu.memory_space<vmem>>, %arg3: memref<2x1xf32, #tpu.memory_space<vmem>>) attributes {dimension_semantics = [], scalar_prefetch = 0 : i64, scratch_operands = 0 : i64, tpu.core_type = #tpu.core_type<tc>} {
    %c128 = arith.constant 128 : index
    %c0 = arith.constant 0 : index
    %0 = vector.load %arg2[%c128, %c0] : memref<280x256xf32, #tpu.memory_space<vmem>>, vector<32x96xf32>
    %c128_0 = arith.constant 128 : index
    %c128_1 = arith.constant 128 : index
    %1 = vector.load %arg2[%c128_0, %c128_1] : memref<280x256xf32, #tpu.memory_space<vmem>>, vector<32x64xf32>
    %c160 = arith.constant 160 : index
    %c0_2 = arith.constant 0 : index
    %2 = vector.load %arg2[%c160, %c0_2] : memref<280x256xf32, #tpu.memory_space<vmem>>, vector<32x32xf32>
    %c160_3 = arith.constant 160 : index
    %c128_4 = arith.constant 128 : index
    %3 = vector.load %arg2[%c160_3, %c128_4] : memref<280x256xf32, #tpu.memory_space<vmem>>, vector<32x64xf32>
    %c192 = arith.constant 192 : index
    %c0_5 = arith.constant 0 : index
    %4 = vector.load %arg2[%c192, %c0_5] : memref<280x256xf32, #tpu.memory_space<vmem>>, vector<64x32xf32>
    %c192_6 = arith.constant 192 : index
    %c128_7 = arith.constant 128 : index
    %5 = vector.load %arg2[%c192_6, %c128_7] : memref<280x256xf32, #tpu.memory_space<vmem>>, vector<64x1xf32>
    %c256 = arith.constant 256 : index
    %c0_8 = arith.constant 0 : index
    %6 = vector.load %arg2[%c256, %c0_8] : memref<280x256xf32, #tpu.memory_space<vmem>>, vector<1x96xf32>
    %c256_9 = arith.constant 256 : index
    %c128_10 = arith.constant 128 : index
    %7 = vector.load %arg2[%c256_9, %c128_10] : memref<280x256xf32, #tpu.memory_space<vmem>>, vector<1x64xf32>
    %c264 = arith.constant 264 : index
    %c0_11 = arith.constant 0 : index
    %8 = vector.load %arg2[%c264, %c0_11] : memref<280x256xf32, #tpu.memory_space<vmem>>, vector<1x32xf32>
    %c264_12 = arith.constant 264 : index
    %c32 = arith.constant 32 : index
    %9 = vector.load %arg2[%c264_12, %c32] : memref<280x256xf32, #tpu.memory_space<vmem>>, vector<1x32xf32>
    %c264_13 = arith.constant 264 : index
    %c64 = arith.constant 64 : index
    %10 = vector.load %arg2[%c264_13, %c64] : memref<280x256xf32, #tpu.memory_space<vmem>>, vector<1x32xf32>
    %c264_14 = arith.constant 264 : index
    %c96 = arith.constant 96 : index
    %11 = vector.load %arg2[%c264_14, %c96] : memref<280x256xf32, #tpu.memory_space<vmem>>, vector<1x1xf32>
    %c264_15 = arith.constant 264 : index
    %c128_16 = arith.constant 128 : index
    %12 = vector.load %arg2[%c264_15, %c128_16] : memref<280x256xf32, #tpu.memory_space<vmem>>, vector<1x64xf32>
    %c264_17 = arith.constant 264 : index
    %c192_18 = arith.constant 192 : index
    %13 = vector.load %arg2[%c264_17, %c192_18] : memref<280x256xf32, #tpu.memory_space<vmem>>, vector<1x32xf32>
    %c0_19 = arith.constant 0 : index
    %c0_20 = arith.constant 0 : index
    %14 = vector.load %arg2[%c0_19, %c0_20] : memref<280x256xf32, #tpu.memory_space<vmem>>, vector<32x256xf32>
    %c32_21 = arith.constant 32 : index
    %c0_22 = arith.constant 0 : index
    %15 = vector.load %arg2[%c32_21, %c0_22] : memref<280x256xf32, #tpu.memory_space<vmem>>, vector<32x256xf32>
    %c64_23 = arith.constant 64 : index
    %c0_24 = arith.constant 0 : index
    %16 = vector.load %arg2[%c64_23, %c0_24] : memref<280x256xf32, #tpu.memory_space<vmem>>, vector<64x256xf32>
    %c272 = arith.constant 272 : index
    %c0_25 = arith.constant 0 : index
    %17 = vector.load %arg2[%c272, %c0_25] : memref<280x256xf32, #tpu.memory_space<vmem>>, vector<1x256xf32>
    %c0_26 = arith.constant 0 : index
    %c0_27 = arith.constant 0 : index
    %18 = vector.load %arg0[%c0_26, %c0_27] : memref<16x32xf32, #tpu.memory_space<vmem>>, vector<16x32xf32>
    %cst = arith.constant dense<0.000000e+00> : vector<16x96xf32>
    %19 = tpu.matmul %18, %0, %cst {dimension_numbers = #tpu.dot_dimension_numbers<[1], [0], [0], [1], [0, 0, 1, 1], [], []>} : vector<16x32xf32>, vector<32x96xf32>, vector<16x96xf32> -> vector<16x96xf32>
    %20 = vector.broadcast %6 : vector<1x96xf32> to vector<16x96xf32>
    %21 = arith.addf %19, %20 : vector<16x96xf32>
    %22 = vector.extract_strided_slice %21 {offsets = [0, 0], sizes = [16, 32], strides = [1, 1]} : vector<16x96xf32> to vector<16x32xf32>
    %23 = vector.extract_strided_slice %21 {offsets = [0, 32], sizes = [16, 32], strides = [1, 1]} : vector<16x96xf32> to vector<16x32xf32>
    %24 = vector.extract_strided_slice %21 {offsets = [0, 64], sizes = [16, 32], strides = [1, 1]} : vector<16x96xf32> to vector<16x32xf32>
    %25 = tpu.iota {dimensions = array<i32: 0>} : vector<16x16xi32>
    %26 = tpu.iota {dimensions = array<i32: 1>} : vector<16x16xi32>
    %c2_i32 = arith.constant 2 : i32
    %c0_i32 = arith.constant 0 : i32
    %27 = arith.cmpi eq, %c2_i32, %c0_i32 : i32
    %c1_i32 = arith.constant 1 : i32
    %28 = arith.select %27, %c1_i32, %c2_i32 : i32
    %29 = vector.broadcast %28 : i32 to vector<16x16xi32>
    %30 = arith.remsi %25, %29 : vector<16x16xi32>
    %c0_i32_28 = arith.constant 0 : i32
    %31 = vector.broadcast %c0_i32_28 : i32 to vector<16x16xi32>
    %32 = arith.cmpi ne, %30, %31 : vector<16x16xi32>
    %c0_i32_29 = arith.constant 0 : i32
    %33 = vector.broadcast %c0_i32_29 : i32 to vector<16x16xi32>
    %34 = arith.cmpi slt, %30, %33 : vector<16x16xi32>
    %c0_i32_30 = arith.constant 0 : i32
    %35 = arith.cmpi slt, %28, %c0_i32_30 : i32
    %36 = vector.broadcast %35 : i1 to vector<16x16xi1>
    %37 = vector.broadcast %36 : vector<16x16xi1> to vector<16x16xi1>
    %38 = arith.xori %34, %37 : vector<16x16xi1>
    %39 = arith.andi %38, %32 : vector<16x16xi1>
    %40 = vector.broadcast %28 : i32 to vector<16x16xi32>
    %41 = arith.addi %30, %40 : vector<16x16xi32>
    %42 = arith.select %39, %41, %30 : vector<16x16xi1>, vector<16x16xi32>
    %c2_i32_31 = arith.constant 2 : i32
    %c0_i32_32 = arith.constant 0 : i32
    %43 = arith.cmpi eq, %c2_i32_31, %c0_i32_32 : i32
    %c1_i32_33 = arith.constant 1 : i32
    %44 = arith.select %43, %c1_i32_33, %c2_i32_31 : i32
    %45 = vector.broadcast %44 : i32 to vector<16x16xi32>
    %46 = arith.remsi %26, %45 : vector<16x16xi32>
    %c0_i32_34 = arith.constant 0 : i32
    %47 = vector.broadcast %c0_i32_34 : i32 to vector<16x16xi32>
    %48 = arith.cmpi ne, %46, %47 : vector<16x16xi32>
    %c0_i32_35 = arith.constant 0 : i32
    %49 = vector.broadcast %c0_i32_35 : i32 to vector<16x16xi32>
    %50 = arith.cmpi slt, %46, %49 : vector<16x16xi32>
    %c0_i32_36 = arith.constant 0 : i32
    %51 = arith.cmpi slt, %44, %c0_i32_36 : i32
    %52 = vector.broadcast %51 : i1 to vector<16x16xi1>
    %53 = vector.broadcast %52 : vector<16x16xi1> to vector<16x16xi1>
    %54 = arith.xori %50, %53 : vector<16x16xi1>
    %55 = arith.andi %54, %48 : vector<16x16xi1>
    %56 = vector.broadcast %44 : i32 to vector<16x16xi32>
    %57 = arith.addi %46, %56 : vector<16x16xi32>
    %58 = arith.select %55, %57, %46 : vector<16x16xi1>, vector<16x16xi32>
    %59 = arith.cmpi eq, %42, %58 : vector<16x16xi32>
    %cst_37 = arith.constant 0.353553385 : f32
    %cst_38 = arith.constant 0.000000e+00 : f32
    %60 = vector.broadcast %cst_37 : f32 to vector<16x16xf32>
    %61 = vector.broadcast %cst_38 : f32 to vector<16x16xf32>
    %62 = arith.select %59, %60, %61 : vector<16x16xi1>, vector<16x16xf32>
    %63 = vector.extract_strided_slice %22 {offsets = [0, 0], sizes = [16, 8], strides = [1, 1]} : vector<16x32xf32> to vector<16x8xf32>
    %64 = vector.extract_strided_slice %23 {offsets = [0, 0], sizes = [16, 8], strides = [1, 1]} : vector<16x32xf32> to vector<16x8xf32>
    %65 = vector.extract_strided_slice %24 {offsets = [0, 0], sizes = [16, 8], strides = [1, 1]} : vector<16x32xf32> to vector<16x8xf32>
    %cst_39 = arith.constant dense<0.000000e+00> : vector<16x16xf32>
    %66 = tpu.matmul %63, %64, %cst_39 {dimension_numbers = #tpu.dot_dimension_numbers<[1], [1], [0], [0], [0, 0, 1, 0], [], []>} : vector<16x8xf32>, vector<16x8xf32>, vector<16x16xf32> -> vector<16x16xf32>
    %67 = arith.mulf %66, %62 : vector<16x16xf32>
    %cst_40 = arith.constant dense<0.000000e+00> : vector<16x8xf32>
    %68 = tpu.matmul %67, %65, %cst_40 {dimension_numbers = #tpu.dot_dimension_numbers<[1], [0], [0], [1], [0, 0, 1, 1], [], []>} : vector<16x16xf32>, vector<16x8xf32>, vector<16x8xf32> -> vector<16x8xf32>
    %69 = vector.extract_strided_slice %22 {offsets = [0, 8], sizes = [16, 8], strides = [1, 1]} : vector<16x32xf32> to vector<16x8xf32>
    %70 = vector.extract_strided_slice %23 {offsets = [0, 8], sizes = [16, 8], strides = [1, 1]} : vector<16x32xf32> to vector<16x8xf32>
    %71 = vector.extract_strided_slice %24 {offsets = [0, 8], sizes = [16, 8], strides = [1, 1]} : vector<16x32xf32> to vector<16x8xf32>
    %cst_41 = arith.constant dense<0.000000e+00> : vector<16x16xf32>
    %72 = tpu.matmul %69, %70, %cst_41 {dimension_numbers = #tpu.dot_dimension_numbers<[1], [1], [0], [0], [0, 0, 1, 0], [], []>} : vector<16x8xf32>, vector<16x8xf32>, vector<16x16xf32> -> vector<16x16xf32>
    %73 = arith.mulf %72, %62 : vector<16x16xf32>
    %cst_42 = arith.constant dense<0.000000e+00> : vector<16x8xf32>
    %74 = tpu.matmul %73, %71, %cst_42 {dimension_numbers = #tpu.dot_dimension_numbers<[1], [0], [0], [1], [0, 0, 1, 1], [], []>} : vector<16x16xf32>, vector<16x8xf32>, vector<16x8xf32> -> vector<16x8xf32>
    %75 = vector.extract_strided_slice %22 {offsets = [0, 16], sizes = [16, 8], strides = [1, 1]} : vector<16x32xf32> to vector<16x8xf32>
    %76 = vector.extract_strided_slice %23 {offsets = [0, 16], sizes = [16, 8], strides = [1, 1]} : vector<16x32xf32> to vector<16x8xf32>
    %77 = vector.extract_strided_slice %24 {offsets = [0, 16], sizes = [16, 8], strides = [1, 1]} : vector<16x32xf32> to vector<16x8xf32>
    %cst_43 = arith.constant dense<0.000000e+00> : vector<16x16xf32>
    %78 = tpu.matmul %75, %76, %cst_43 {dimension_numbers = #tpu.dot_dimension_numbers<[1], [1], [0], [0], [0, 0, 1, 0], [], []>} : vector<16x8xf32>, vector<16x8xf32>, vector<16x16xf32> -> vector<16x16xf32>
    %79 = arith.mulf %78, %62 : vector<16x16xf32>
    %cst_44 = arith.constant dense<0.000000e+00> : vector<16x8xf32>
    %80 = tpu.matmul %79, %77, %cst_44 {dimension_numbers = #tpu.dot_dimension_numbers<[1], [0], [0], [1], [0, 0, 1, 1], [], []>} : vector<16x16xf32>, vector<16x8xf32>, vector<16x8xf32> -> vector<16x8xf32>
    %81 = vector.extract_strided_slice %22 {offsets = [0, 24], sizes = [16, 8], strides = [1, 1]} : vector<16x32xf32> to vector<16x8xf32>
    %82 = vector.extract_strided_slice %23 {offsets = [0, 24], sizes = [16, 8], strides = [1, 1]} : vector<16x32xf32> to vector<16x8xf32>
    %83 = vector.extract_strided_slice %24 {offsets = [0, 24], sizes = [16, 8], strides = [1, 1]} : vector<16x32xf32> to vector<16x8xf32>
    %cst_45 = arith.constant dense<0.000000e+00> : vector<16x16xf32>
    %84 = tpu.matmul %81, %82, %cst_45 {dimension_numbers = #tpu.dot_dimension_numbers<[1], [1], [0], [0], [0, 0, 1, 0], [], []>} : vector<16x8xf32>, vector<16x8xf32>, vector<16x16xf32> -> vector<16x16xf32>
    %85 = arith.mulf %84, %62 : vector<16x16xf32>
    %cst_46 = arith.constant dense<0.000000e+00> : vector<16x8xf32>
    %86 = tpu.matmul %85, %83, %cst_46 {dimension_numbers = #tpu.dot_dimension_numbers<[1], [0], [0], [1], [0, 0, 1, 1], [], []>} : vector<16x16xf32>, vector<16x8xf32>, vector<16x8xf32> -> vector<16x8xf32>
    %87 = tpu.concatenate %68, %74, %80, %86 in 1 : vector<16x8xf32>, vector<16x8xf32>, vector<16x8xf32>, vector<16x8xf32> -> vector<16x32xf32>
    %cst_47 = arith.constant dense<0.000000e+00> : vector<16x32xf32>
    %88 = tpu.matmul %87, %2, %cst_47 {dimension_numbers = #tpu.dot_dimension_numbers<[1], [0], [0], [1], [0, 0, 1, 1], [], []>} : vector<16x32xf32>, vector<32x32xf32>, vector<16x32xf32> -> vector<16x32xf32>
    %89 = vector.broadcast %8 : vector<1x32xf32> to vector<16x32xf32>
    %90 = arith.addf %88, %89 : vector<16x32xf32>
    %91 = arith.addf %18, %90 : vector<16x32xf32>
    %cst_48 = arith.constant dense<0.000000e+00> : vector<16xf32>
    %92 = vector.multi_reduction <add>, %91, %cst_48 [1] : vector<16x32xf32> to vector<16xf32>
    %93 = vector.shape_cast %92 : vector<16xf32> to vector<16x1xf32>
    %cst_49 = arith.constant 3.200000e+01 : f32
    %94 = vector.broadcast %cst_49 : f32 to vector<16x1xf32>
    %95 = arith.divf %93, %94 : vector<16x1xf32>
    %96 = vector.broadcast %95 : vector<16x1xf32> to vector<16x32xf32>
    %97 = arith.subf %91, %96 : vector<16x32xf32>
    %98 = arith.mulf %97, %97 : vector<16x32xf32>
    %cst_50 = arith.constant dense<0.000000e+00> : vector<16xf32>
    %99 = vector.multi_reduction <add>, %98, %cst_50 [1] : vector<16x32xf32> to vector<16xf32>
    %100 = vector.shape_cast %99 : vector<16xf32> to vector<16x1xf32>
    %cst_51 = arith.constant 0.0322580636 : f32
    %101 = vector.broadcast %cst_51 : f32 to vector<16x1xf32>
    %102 = arith.mulf %100, %101 : vector<16x1xf32>
    %103 = vector.broadcast %9 : vector<1x32xf32> to vector<16x32xf32>
    %104 = arith.mulf %103, %97 : vector<16x32xf32>
    %105 = math.sqrt %102 : vector<16x1xf32>
    %cst_52 = arith.constant 9.99999997E-7 : f32
    %106 = vector.broadcast %cst_52 : f32 to vector<16x1xf32>
    %107 = arith.addf %105, %106 : vector<16x1xf32>
    %108 = vector.broadcast %107 : vector<16x1xf32> to vector<16x32xf32>
    %109 = arith.divf %104, %108 : vector<16x32xf32>
    %110 = vector.broadcast %10 : vector<1x32xf32> to vector<16x32xf32>
    %111 = arith.addf %109, %110 : vector<16x32xf32>
    %cst_53 = arith.constant dense<0.000000e+00> : vector<16x64xf32>
    %112 = tpu.matmul %91, %1, %cst_53 {dimension_numbers = #tpu.dot_dimension_numbers<[1], [0], [0], [1], [0, 0, 1, 1], [], []>} : vector<16x32xf32>, vector<32x64xf32>, vector<16x64xf32> -> vector<16x64xf32>
    %113 = vector.broadcast %7 : vector<1x64xf32> to vector<16x64xf32>
    %114 = arith.addf %112, %113 : vector<16x64xf32>
    %cst_54 = arith.constant 0.000000e+00 : f32
    %115 = vector.broadcast %cst_54 : f32 to vector<16x64xf32>
    %116 = arith.maximumf %114, %115 : vector<16x64xf32>
    %cst_55 = arith.constant dense<0.000000e+00> : vector<16x32xf32>
    %117 = tpu.matmul %116, %4, %cst_55 {dimension_numbers = #tpu.dot_dimension_numbers<[1], [0], [0], [1], [0, 0, 1, 1], [], []>} : vector<16x64xf32>, vector<64x32xf32>, vector<16x32xf32> -> vector<16x32xf32>
    %118 = vector.broadcast %13 : vector<1x32xf32> to vector<16x32xf32>
    %119 = arith.addf %117, %118 : vector<16x32xf32>
    %120 = arith.addf %111, %119 : vector<16x32xf32>
    %c0_56 = arith.constant 0 : index
    %c0_57 = arith.constant 0 : index
    %121 = vector.load %arg1[%c0_56, %c0_57] : memref<16x32xf32, #tpu.memory_space<vmem>>, vector<16x32xf32>
    %cst_58 = arith.constant dense<0.000000e+00> : vector<16x256xf32>
    %122 = tpu.matmul %121, %14, %cst_58 {dimension_numbers = #tpu.dot_dimension_numbers<[1], [0], [0], [1], [0, 0, 1, 1], [], []>} : vector<16x32xf32>, vector<32x256xf32>, vector<16x256xf32> -> vector<16x256xf32>
    %cst_59 = arith.constant dense<0.000000e+00> : vector<16x256xf32>
    %123 = tpu.matmul %120, %15, %cst_59 {dimension_numbers = #tpu.dot_dimension_numbers<[1], [0], [0], [1], [0, 0, 1, 1], [], []>} : vector<16x32xf32>, vector<32x256xf32>, vector<16x256xf32> -> vector<16x256xf32>
    %124 = arith.addf %122, %123 : vector<16x256xf32>
    %125 = vector.broadcast %17 : vector<1x256xf32> to vector<16x256xf32>
    %126 = arith.addf %124, %125 : vector<16x256xf32>
    %cst_60 = arith.constant 0.000000e+00 : f32
    %127 = vector.broadcast %cst_60 : f32 to vector<2x64xf32>
    %cst_61 = arith.constant 0.000000e+00 : f32
    %128 = vector.broadcast %cst_61 : f32 to vector<2x64xf32>
    %129 = vector.extract_strided_slice %126 {offsets = [0, 0], sizes = [2, 256], strides = [1, 1]} : vector<16x256xf32> to vector<2x256xf32>
    %cst_62 = arith.constant dense<0.000000e+00> : vector<2x256xf32>
    %130 = tpu.matmul %127, %16, %cst_62 {dimension_numbers = #tpu.dot_dimension_numbers<[1], [0], [0], [1], [0, 0, 1, 1], [], []>} : vector<2x64xf32>, vector<64x256xf32>, vector<2x256xf32> -> vector<2x256xf32>
    %131 = arith.addf %129, %130 : vector<2x256xf32>
    %132 = arith.negf %131 : vector<2x256xf32>
    %133 = math.exp %132 : vector<2x256xf32>
    %cst_63 = arith.constant 1.000000e+00 : f32
    %134 = vector.broadcast %cst_63 : f32 to vector<2x256xf32>
    %135 = arith.addf %134, %133 : vector<2x256xf32>
    %136 = arith.divf %134, %135 : vector<2x256xf32>
    %137 = math.tanh %131 : vector<2x256xf32>
    %138 = vector.extract_strided_slice %136 {offsets = [0, 0], sizes = [2, 64], strides = [1, 1]} : vector<2x256xf32> to vector<2x64xf32>
    %139 = vector.extract_strided_slice %136 {offsets = [0, 64], sizes = [2, 64], strides = [1, 1]} : vector<2x256xf32> to vector<2x64xf32>
    %140 = vector.extract_strided_slice %136 {offsets = [0, 128], sizes = [2, 64], strides = [1, 1]} : vector<2x256xf32> to vector<2x64xf32>
    %141 = vector.extract_strided_slice %137 {offsets = [0, 192], sizes = [2, 64], strides = [1, 1]} : vector<2x256xf32> to vector<2x64xf32>
    %142 = arith.mulf %139, %128 : vector<2x64xf32>
    %143 = arith.mulf %138, %141 : vector<2x64xf32>
    %144 = arith.addf %142, %143 : vector<2x64xf32>
    %145 = math.tanh %144 : vector<2x64xf32>
    %146 = arith.mulf %140, %145 : vector<2x64xf32>
    %147 = vector.extract_strided_slice %126 {offsets = [2, 0], sizes = [2, 256], strides = [1, 1]} : vector<16x256xf32> to vector<2x256xf32>
    %cst_64 = arith.constant dense<0.000000e+00> : vector<2x256xf32>
    %148 = tpu.matmul %146, %16, %cst_64 {dimension_numbers = #tpu.dot_dimension_numbers<[1], [0], [0], [1], [0, 0, 1, 1], [], []>} : vector<2x64xf32>, vector<64x256xf32>, vector<2x256xf32> -> vector<2x256xf32>
    %149 = arith.addf %147, %148 : vector<2x256xf32>
    %150 = arith.negf %149 : vector<2x256xf32>
    %151 = math.exp %150 : vector<2x256xf32>
    %cst_65 = arith.constant 1.000000e+00 : f32
    %152 = vector.broadcast %cst_65 : f32 to vector<2x256xf32>
    %153 = arith.addf %152, %151 : vector<2x256xf32>
    %154 = arith.divf %152, %153 : vector<2x256xf32>
    %155 = math.tanh %149 : vector<2x256xf32>
    %156 = vector.extract_strided_slice %154 {offsets = [0, 0], sizes = [2, 64], strides = [1, 1]} : vector<2x256xf32> to vector<2x64xf32>
    %157 = vector.extract_strided_slice %154 {offsets = [0, 64], sizes = [2, 64], strides = [1, 1]} : vector<2x256xf32> to vector<2x64xf32>
    %158 = vector.extract_strided_slice %154 {offsets = [0, 128], sizes = [2, 64], strides = [1, 1]} : vector<2x256xf32> to vector<2x64xf32>
    %159 = vector.extract_strided_slice %155 {offsets = [0, 192], sizes = [2, 64], strides = [1, 1]} : vector<2x256xf32> to vector<2x64xf32>
    %160 = arith.mulf %157, %144 : vector<2x64xf32>
    %161 = arith.mulf %156, %159 : vector<2x64xf32>
    %162 = arith.addf %160, %161 : vector<2x64xf32>
    %163 = math.tanh %162 : vector<2x64xf32>
    %164 = arith.mulf %158, %163 : vector<2x64xf32>
    %165 = vector.extract_strided_slice %126 {offsets = [4, 0], sizes = [2, 256], strides = [1, 1]} : vector<16x256xf32> to vector<2x256xf32>
    %cst_66 = arith.constant dense<0.000000e+00> : vector<2x256xf32>
    %166 = tpu.matmul %164, %16, %cst_66 {dimension_numbers = #tpu.dot_dimension_numbers<[1], [0], [0], [1], [0, 0, 1, 1], [], []>} : vector<2x64xf32>, vector<64x256xf32>, vector<2x256xf32> -> vector<2x256xf32>
    %167 = arith.addf %165, %166 : vector<2x256xf32>
    %168 = arith.negf %167 : vector<2x256xf32>
    %169 = math.exp %168 : vector<2x256xf32>
    %cst_67 = arith.constant 1.000000e+00 : f32
    %170 = vector.broadcast %cst_67 : f32 to vector<2x256xf32>
    %171 = arith.addf %170, %169 : vector<2x256xf32>
    %172 = arith.divf %170, %171 : vector<2x256xf32>
    %173 = math.tanh %167 : vector<2x256xf32>
    %174 = vector.extract_strided_slice %172 {offsets = [0, 0], sizes = [2, 64], strides = [1, 1]} : vector<2x256xf32> to vector<2x64xf32>
    %175 = vector.extract_strided_slice %172 {offsets = [0, 64], sizes = [2, 64], strides = [1, 1]} : vector<2x256xf32> to vector<2x64xf32>
    %176 = vector.extract_strided_slice %172 {offsets = [0, 128], sizes = [2, 64], strides = [1, 1]} : vector<2x256xf32> to vector<2x64xf32>
    %177 = vector.extract_strided_slice %173 {offsets = [0, 192], sizes = [2, 64], strides = [1, 1]} : vector<2x256xf32> to vector<2x64xf32>
    %178 = arith.mulf %175, %162 : vector<2x64xf32>
    %179 = arith.mulf %174, %177 : vector<2x64xf32>
    %180 = arith.addf %178, %179 : vector<2x64xf32>
    %181 = math.tanh %180 : vector<2x64xf32>
    %182 = arith.mulf %176, %181 : vector<2x64xf32>
    %183 = vector.extract_strided_slice %126 {offsets = [6, 0], sizes = [2, 256], strides = [1, 1]} : vector<16x256xf32> to vector<2x256xf32>
    %cst_68 = arith.constant dense<0.000000e+00> : vector<2x256xf32>
    %184 = tpu.matmul %182, %16, %cst_68 {dimension_numbers = #tpu.dot_dimension_numbers<[1], [0], [0], [1], [0, 0, 1, 1], [], []>} : vector<2x64xf32>, vector<64x256xf32>, vector<2x256xf32> -> vector<2x256xf32>
    %185 = arith.addf %183, %184 : vector<2x256xf32>
    %186 = arith.negf %185 : vector<2x256xf32>
    %187 = math.exp %186 : vector<2x256xf32>
    %cst_69 = arith.constant 1.000000e+00 : f32
    %188 = vector.broadcast %cst_69 : f32 to vector<2x256xf32>
    %189 = arith.addf %188, %187 : vector<2x256xf32>
    %190 = arith.divf %188, %189 : vector<2x256xf32>
    %191 = math.tanh %185 : vector<2x256xf32>
    %192 = vector.extract_strided_slice %190 {offsets = [0, 0], sizes = [2, 64], strides = [1, 1]} : vector<2x256xf32> to vector<2x64xf32>
    %193 = vector.extract_strided_slice %190 {offsets = [0, 64], sizes = [2, 64], strides = [1, 1]} : vector<2x256xf32> to vector<2x64xf32>
    %194 = vector.extract_strided_slice %190 {offsets = [0, 128], sizes = [2, 64], strides = [1, 1]} : vector<2x256xf32> to vector<2x64xf32>
    %195 = vector.extract_strided_slice %191 {offsets = [0, 192], sizes = [2, 64], strides = [1, 1]} : vector<2x256xf32> to vector<2x64xf32>
    %196 = arith.mulf %193, %180 : vector<2x64xf32>
    %197 = arith.mulf %192, %195 : vector<2x64xf32>
    %198 = arith.addf %196, %197 : vector<2x64xf32>
    %199 = math.tanh %198 : vector<2x64xf32>
    %200 = arith.mulf %194, %199 : vector<2x64xf32>
    %201 = vector.extract_strided_slice %126 {offsets = [8, 0], sizes = [2, 256], strides = [1, 1]} : vector<16x256xf32> to vector<2x256xf32>
    %cst_70 = arith.constant dense<0.000000e+00> : vector<2x256xf32>
    %202 = tpu.matmul %200, %16, %cst_70 {dimension_numbers = #tpu.dot_dimension_numbers<[1], [0], [0], [1], [0, 0, 1, 1], [], []>} : vector<2x64xf32>, vector<64x256xf32>, vector<2x256xf32> -> vector<2x256xf32>
    %203 = arith.addf %201, %202 : vector<2x256xf32>
    %204 = arith.negf %203 : vector<2x256xf32>
    %205 = math.exp %204 : vector<2x256xf32>
    %cst_71 = arith.constant 1.000000e+00 : f32
    %206 = vector.broadcast %cst_71 : f32 to vector<2x256xf32>
    %207 = arith.addf %206, %205 : vector<2x256xf32>
    %208 = arith.divf %206, %207 : vector<2x256xf32>
    %209 = math.tanh %203 : vector<2x256xf32>
    %210 = vector.extract_strided_slice %208 {offsets = [0, 0], sizes = [2, 64], strides = [1, 1]} : vector<2x256xf32> to vector<2x64xf32>
    %211 = vector.extract_strided_slice %208 {offsets = [0, 64], sizes = [2, 64], strides = [1, 1]} : vector<2x256xf32> to vector<2x64xf32>
    %212 = vector.extract_strided_slice %208 {offsets = [0, 128], sizes = [2, 64], strides = [1, 1]} : vector<2x256xf32> to vector<2x64xf32>
    %213 = vector.extract_strided_slice %209 {offsets = [0, 192], sizes = [2, 64], strides = [1, 1]} : vector<2x256xf32> to vector<2x64xf32>
    %214 = arith.mulf %211, %198 : vector<2x64xf32>
    %215 = arith.mulf %210, %213 : vector<2x64xf32>
    %216 = arith.addf %214, %215 : vector<2x64xf32>
    %217 = math.tanh %216 : vector<2x64xf32>
    %218 = arith.mulf %212, %217 : vector<2x64xf32>
    %219 = vector.extract_strided_slice %126 {offsets = [10, 0], sizes = [2, 256], strides = [1, 1]} : vector<16x256xf32> to vector<2x256xf32>
    %cst_72 = arith.constant dense<0.000000e+00> : vector<2x256xf32>
    %220 = tpu.matmul %218, %16, %cst_72 {dimension_numbers = #tpu.dot_dimension_numbers<[1], [0], [0], [1], [0, 0, 1, 1], [], []>} : vector<2x64xf32>, vector<64x256xf32>, vector<2x256xf32> -> vector<2x256xf32>
    %221 = arith.addf %219, %220 : vector<2x256xf32>
    %222 = arith.negf %221 : vector<2x256xf32>
    %223 = math.exp %222 : vector<2x256xf32>
    %cst_73 = arith.constant 1.000000e+00 : f32
    %224 = vector.broadcast %cst_73 : f32 to vector<2x256xf32>
    %225 = arith.addf %224, %223 : vector<2x256xf32>
    %226 = arith.divf %224, %225 : vector<2x256xf32>
    %227 = math.tanh %221 : vector<2x256xf32>
    %228 = vector.extract_strided_slice %226 {offsets = [0, 0], sizes = [2, 64], strides = [1, 1]} : vector<2x256xf32> to vector<2x64xf32>
    %229 = vector.extract_strided_slice %226 {offsets = [0, 64], sizes = [2, 64], strides = [1, 1]} : vector<2x256xf32> to vector<2x64xf32>
    %230 = vector.extract_strided_slice %226 {offsets = [0, 128], sizes = [2, 64], strides = [1, 1]} : vector<2x256xf32> to vector<2x64xf32>
    %231 = vector.extract_strided_slice %227 {offsets = [0, 192], sizes = [2, 64], strides = [1, 1]} : vector<2x256xf32> to vector<2x64xf32>
    %232 = arith.mulf %229, %216 : vector<2x64xf32>
    %233 = arith.mulf %228, %231 : vector<2x64xf32>
    %234 = arith.addf %232, %233 : vector<2x64xf32>
    %235 = math.tanh %234 : vector<2x64xf32>
    %236 = arith.mulf %230, %235 : vector<2x64xf32>
    %237 = vector.extract_strided_slice %126 {offsets = [12, 0], sizes = [2, 256], strides = [1, 1]} : vector<16x256xf32> to vector<2x256xf32>
    %cst_74 = arith.constant dense<0.000000e+00> : vector<2x256xf32>
    %238 = tpu.matmul %236, %16, %cst_74 {dimension_numbers = #tpu.dot_dimension_numbers<[1], [0], [0], [1], [0, 0, 1, 1], [], []>} : vector<2x64xf32>, vector<64x256xf32>, vector<2x256xf32> -> vector<2x256xf32>
    %239 = arith.addf %237, %238 : vector<2x256xf32>
    %240 = arith.negf %239 : vector<2x256xf32>
    %241 = math.exp %240 : vector<2x256xf32>
    %cst_75 = arith.constant 1.000000e+00 : f32
    %242 = vector.broadcast %cst_75 : f32 to vector<2x256xf32>
    %243 = arith.addf %242, %241 : vector<2x256xf32>
    %244 = arith.divf %242, %243 : vector<2x256xf32>
    %245 = math.tanh %239 : vector<2x256xf32>
    %246 = vector.extract_strided_slice %244 {offsets = [0, 0], sizes = [2, 64], strides = [1, 1]} : vector<2x256xf32> to vector<2x64xf32>
    %247 = vector.extract_strided_slice %244 {offsets = [0, 64], sizes = [2, 64], strides = [1, 1]} : vector<2x256xf32> to vector<2x64xf32>
    %248 = vector.extract_strided_slice %244 {offsets = [0, 128], sizes = [2, 64], strides = [1, 1]} : vector<2x256xf32> to vector<2x64xf32>
    %249 = vector.extract_strided_slice %245 {offsets = [0, 192], sizes = [2, 64], strides = [1, 1]} : vector<2x256xf32> to vector<2x64xf32>
    %250 = arith.mulf %247, %234 : vector<2x64xf32>
    %251 = arith.mulf %246, %249 : vector<2x64xf32>
    %252 = arith.addf %250, %251 : vector<2x64xf32>
    %253 = math.tanh %252 : vector<2x64xf32>
    %254 = arith.mulf %248, %253 : vector<2x64xf32>
    %255 = vector.extract_strided_slice %126 {offsets = [14, 0], sizes = [2, 256], strides = [1, 1]} : vector<16x256xf32> to vector<2x256xf32>
    %cst_76 = arith.constant dense<0.000000e+00> : vector<2x256xf32>
    %256 = tpu.matmul %254, %16, %cst_76 {dimension_numbers = #tpu.dot_dimension_numbers<[1], [0], [0], [1], [0, 0, 1, 1], [], []>} : vector<2x64xf32>, vector<64x256xf32>, vector<2x256xf32> -> vector<2x256xf32>
    %257 = arith.addf %255, %256 : vector<2x256xf32>
    %258 = arith.negf %257 : vector<2x256xf32>
    %259 = math.exp %258 : vector<2x256xf32>
    %cst_77 = arith.constant 1.000000e+00 : f32
    %260 = vector.broadcast %cst_77 : f32 to vector<2x256xf32>
    %261 = arith.addf %260, %259 : vector<2x256xf32>
    %262 = arith.divf %260, %261 : vector<2x256xf32>
    %263 = math.tanh %257 : vector<2x256xf32>
    %264 = vector.extract_strided_slice %262 {offsets = [0, 0], sizes = [2, 64], strides = [1, 1]} : vector<2x256xf32> to vector<2x64xf32>
    %265 = vector.extract_strided_slice %262 {offsets = [0, 64], sizes = [2, 64], strides = [1, 1]} : vector<2x256xf32> to vector<2x64xf32>
    %266 = vector.extract_strided_slice %262 {offsets = [0, 128], sizes = [2, 64], strides = [1, 1]} : vector<2x256xf32> to vector<2x64xf32>
    %267 = vector.extract_strided_slice %263 {offsets = [0, 192], sizes = [2, 64], strides = [1, 1]} : vector<2x256xf32> to vector<2x64xf32>
    %268 = arith.mulf %265, %252 : vector<2x64xf32>
    %269 = arith.mulf %264, %267 : vector<2x64xf32>
    %270 = arith.addf %268, %269 : vector<2x64xf32>
    %271 = math.tanh %270 : vector<2x64xf32>
    %272 = arith.mulf %266, %271 : vector<2x64xf32>
    %273 = vector.extract_strided_slice %272 {offsets = [0, 0], sizes = [2, 32], strides = [1, 1]} : vector<2x64xf32> to vector<2x32xf32>
    %274 = vector.extract_strided_slice %272 {offsets = [0, 32], sizes = [2, 32], strides = [1, 1]} : vector<2x64xf32> to vector<2x32xf32>
    %275 = arith.addf %273, %274 : vector<2x32xf32>
    %cst_78 = arith.constant dense<0.000000e+00> : vector<2x64xf32>
    %276 = tpu.matmul %275, %3, %cst_78 {dimension_numbers = #tpu.dot_dimension_numbers<[1], [0], [0], [1], [0, 0, 1, 1], [], []>} : vector<2x32xf32>, vector<32x64xf32>, vector<2x64xf32> -> vector<2x64xf32>
    %277 = vector.broadcast %12 : vector<1x64xf32> to vector<2x64xf32>
    %278 = arith.addf %276, %277 : vector<2x64xf32>
    %cst_79 = arith.constant 0.000000e+00 : f32
    %279 = vector.broadcast %cst_79 : f32 to vector<2x64xf32>
    %280 = arith.maximumf %278, %279 : vector<2x64xf32>
    %cst_80 = arith.constant dense<0.000000e+00> : vector<2x1xf32>
    %281 = tpu.matmul %280, %5, %cst_80 {dimension_numbers = #tpu.dot_dimension_numbers<[1], [0], [0], [1], [0, 0, 1, 1], [], []>} : vector<2x64xf32>, vector<64x1xf32>, vector<2x1xf32> -> vector<2x1xf32>
    %282 = vector.broadcast %11 : vector<1x1xf32> to vector<2x1xf32>
    %283 = arith.addf %281, %282 : vector<2x1xf32>
    %284 = arith.negf %283 : vector<2x1xf32>
    %285 = math.exp %284 : vector<2x1xf32>
    %cst_81 = arith.constant 1.000000e+00 : f32
    %286 = vector.broadcast %cst_81 : f32 to vector<2x1xf32>
    %287 = arith.addf %286, %285 : vector<2x1xf32>
    %288 = arith.divf %286, %287 : vector<2x1xf32>
    %c0_82 = arith.constant 0 : index
    %c0_83 = arith.constant 0 : index
    %289 = vector.load %arg3[%c0_82, %c0_83] : memref<2x1xf32, #tpu.memory_space<vmem>>, vector<2x1xf32>
    tpu.vector_store %arg3[%c0_82, %c0_83], %288 {strides = array<i32>} : memref<2x1xf32, #tpu.memory_space<vmem>>, vector<2x1xf32>,
    return
  }
}

</mosaic_0001>

<llo_original>
// kernel: model_forward.1
$region0: #{model_forward.1}
  #allocation0 [shape = 'u32[]', space=smem, size = 0x4, offset = 0x4, fixed_abs, tag = 'smem constant byte address 0x4 - core index']
  #allocation1 [shape = 'u32[72,128]{1,0:T(1,128)}', space=vmem, size = 0x9000, scoped, tag = 'internal scratch']
  %s0 = inlined_call_operand.vmem [shape: f32[16,32], index: 0, kind: input, shape index: {}]
  %s1 = inlined_call_operand.vmem [shape: f32[16,32], index: 1, kind: input, shape index: {}]
  %s2 = inlined_call_operand.vmem [shape: f32[280,256], index: 2, kind: input, shape index: {}]
  %s3 = inlined_call_operand.vmem [shape: f32[2,1], index: 3, kind: output, shape index: {}]
  %s4 = sld [smem:[#allocation0]]
  $region22: #{model_forward.1} parent=0
    _
  %s6 = ssub.s32 1, %s4
  %s7 = scalar_select 0, %s6, %s4
  // Predicated region
  $region2: #{model_forward.1} parent=0 // pred_check
    _
  $region3: #{model_forward.1} parent=0 // pred_check_branch
    %9 = sbr.rel (0) target = $region5
  $region4: #{model_forward.1} parent=0 // pred_region
    _
  $region5: #{model_forward.1} parent=0 // pred_fallthru
    _
  // Predicated region
  $region6: #{model_forward.1} parent=0 // pred_check
    _
  $region7: #{model_forward.1} parent=0 // pred_check_branch
    %11 = sbr.rel (0) target = $region9
  $region8: #{model_forward.1} parent=0 // pred_region
    _
  $region9: #{model_forward.1} parent=0 // pred_fallthru
    _
  // Predicated region
  $region10: #{model_forward.1} parent=0 // pred_check
    _
  $region11: #{model_forward.1} parent=0 // pred_check_branch
    %13 = sbr.rel (0) target = $region13
  $region12: #{model_forward.1} parent=0 // pred_region
    _
  $region13: #{model_forward.1} parent=0 // pred_fallthru
    _
  %v14 = vld [vmem:[%s2 + $0x100] sm:$0xff]
  %v15 = vld [vmem:[%s2 + $0x110] sm:$0xff]
  %v16 = vld [vmem:[%s2 + $0x120] sm:$0xff]
  %v17 = vld [vmem:[%s2 + $0x130] sm:$0xff]
  %v18 = vld [vmem:[%s2 + $0x108] sm:$0xff]
  %v19 = vld [vmem:[%s2 + $0x118] sm:$0xff]
  %v20 = vld [vmem:[%s2 + $0x128] sm:$0xff]
  %v21 = vld [vmem:[%s2 + $0x138] sm:$0xff]
  %v22 = vld [vmem:[%s2 + $0x140] sm:$0xff]
  %v23 = vld [vmem:[%s2 + $0x150] sm:$0xff]
  %v24 = vld [vmem:[%s2 + $0x160] sm:$0xff]
  %v25 = vld [vmem:[%s2 + $0x170] sm:$0xff]
  %v26 = vld [vmem:[%s2 + $0x148] sm:$0xff]
  %v27 = vld [vmem:[%s2 + $0x158] sm:$0xff]
  %v28 = vld [vmem:[%s2 + $0x168] sm:$0xff]
  %v29 = vld [vmem:[%s2 + $0x178] sm:$0xff]
  %v30 = vld [vmem:[%s2 + $0x180] sm:$0xff]
  %v31 = vld [vmem:[%s2 + $0x190] sm:$0xff]
  %v32 = vld [vmem:[%s2 + $0x1a0] sm:$0xff]
  %v33 = vld [vmem:[%s2 + $0x1b0] sm:$0xff]
  %v34 = vld [vmem:[%s2 + $0x1c0] sm:$0xff]
  %v35 = vld [vmem:[%s2 + $0x1d0] sm:$0xff]
  %v36 = vld [vmem:[%s2 + $0x1e0] sm:$0xff]
  %v37 = vld [vmem:[%s2 + $0x1f0] sm:$0xff]
  %v38 = vld [vmem:[%s2 + $0x188] sm:$0xff]
  %v39 = vld [vmem:[%s2 + $0x198] sm:$0xff]
  %v40 = vld [vmem:[%s2 + $0x1a8] sm:$0xff]
  %v41 = vld [vmem:[%s2 + $0x1b8] sm:$0xff]
  %v42 = vld [vmem:[%s2 + $0x1c8] sm:$0xff]
  %v43 = vld [vmem:[%s2 + $0x1d8] sm:$0xff]
  %v44 = vld [vmem:[%s2 + $0x1e8] sm:$0xff]
  %v45 = vld [vmem:[%s2 + $0x1f8] sm:$0xff]
  %v46 = vld [vmem:[%s2 + $0x200] ss:$0 sm:$0xff]
  %v47 = vld [vmem:[%s2 + $0x208] ss:$0 sm:$0xff]
  %v48 = vld [vmem:[%s2 + $0x210] ss:$0 sm:$0xff]
  %v49 = vld [vmem:[%s2 + $0x218] ss:$0 sm:$0xff]
  %v50 = vld [vmem:[%s2] sm:$0xff]
  %v51 = vld [vmem:[%s2 + $0x8] sm:$0xff]
  %v52 = vld [vmem:[%s2 + $0x10] sm:$0xff]
  %v53 = vld [vmem:[%s2 + $0x18] sm:$0xff]
  %v54 = vld [vmem:[%s2 + $0x20] sm:$0xff]
  %v55 = vld [vmem:[%s2 + $0x28] sm:$0xff]
  %v56 = vld [vmem:[%s2 + $0x30] sm:$0xff]
  %v57 = vld [vmem:[%s2 + $0x38] sm:$0xff]
  %v58 = vld [vmem:[%s2 + $0x40] sm:$0xff]
  %v59 = vld [vmem:[%s2 + $0x48] sm:$0xff]
  %v60 = vld [vmem:[%s2 + $0x50] sm:$0xff]
  %v61 = vld [vmem:[%s2 + $0x58] sm:$0xff]
  %v62 = vld [vmem:[%s2 + $0x60] sm:$0xff]
  %v63 = vld [vmem:[%s2 + $0x68] sm:$0xff]
  %v64 = vld [vmem:[%s2 + $0x70] sm:$0xff]
  %v65 = vld [vmem:[%s2 + $0x78] sm:$0xff]
  %v66 = vld [vmem:[%s2 + $0x80] sm:$0xff]
  %v67 = vld [vmem:[%s2 + $0x88] sm:$0xff]
  %v68 = vld [vmem:[%s2 + $0x90] sm:$0xff]
  %v69 = vld [vmem:[%s2 + $0x98] sm:$0xff]
  %v70 = vld [vmem:[%s2 + $0xa0] sm:$0xff]
  %v71 = vld [vmem:[%s2 + $0xa8] sm:$0xff]
  %v72 = vld [vmem:[%s2 + $0xb0] sm:$0xff]
  %v73 = vld [vmem:[%s2 + $0xb8] sm:$0xff]
  %v74 = vld [vmem:[%s2 + $0xc0] sm:$0xff]
  %v75 = vld [vmem:[%s2 + $0xc8] sm:$0xff]
  %v76 = vld [vmem:[%s2 + $0xd0] sm:$0xff]
  %v77 = vld [vmem:[%s2 + $0xd8] sm:$0xff]
  %v78 = vld [vmem:[%s2 + $0xe0] sm:$0xff]
  %v79 = vld [vmem:[%s2 + $0xe8] sm:$0xff]
  %v80 = vld [vmem:[%s2 + $0xf0] sm:$0xff]
  %v81 = vld [vmem:[%s2 + $0xf8] sm:$0xff]
  %s82 = scalar_lea.vmem %s2, 544
  %v83 = vld [vmem:[%s82] ss:$8 sm:$0x3]
  %v84 = vld [vmem:[%s0] sm:$0xff]
  %v85 = vld [vmem:[%s0 + $0x8] sm:$0xff]
  %vm86 = vcmask 261120
  %v88 = vsel %vm86, %v84, 0
  %v91 = vsel %vm86, %v85, 0
  %93 = vmatpush.msra.mxu0 0.0
  %94 = vmatpush.msra.mxu0 0.0
  %95 = vmatpush.msra.mxu0 0.0
  %96 = vmatpush.msra.mxu0 0.0
  %97 = vmatpush.msra.mxu0 0.0
  %98 = vmatpush.msra.mxu0 0.0
  %99 = vmatpush.msra.mxu0 0.0
  %100 = vmatpush.msra.mxu0 0.0
  %101 = vmatpush.msra.mxu0 0.0
  %102 = vmatpush.msra.mxu0 0.0
  %103 = vmatpush.msra.mxu0 0.0
  %104 = vmatpush.msra.mxu0 0.0
  %105 = vmatpush.msra.mxu0 %v17
  %106 = vmatpush.msra.mxu0 %v16
  %107 = vmatpush.msra.mxu0 %v15
  %108 = vmatpush.msra.mxu0 %v14
  %109 = vmatmul.f32.gmra.mxu0 %v88
  %v110 = vpop.f32.mrf.mxu0
  %v111 = vadd.f32 %v46, %v110
  %112 = vmatmul.f32.gmra.mxu0 %v91
  %v113 = vpop.f32.mrf.mxu0
  %v114 = vadd.f32 %v46, %v113
  %115 = vdwg.mxu0
  %v116 = vlaneseq
  %v117 = vshrl.u32 %v116, 7
  %v118 = vadd.s32 %v117, 8
  %v119 = vlaneseq
  %v120 = vand.u32 %v119, 127
  %vm121 = vcmp.lt.s32.totalorder %v117, 0
  %v122 = vsub.s32 0, %v117
  %v123 = vsel %vm121, %v122, %v117
  %v124 = vshrl.u32 %v123, 1
  %v125 = vand.u32 %v123, 1
  %v126 = vsub.s32 0, %v125
  %v127 = vsel %vm121, %v126, %v125
  %vm128 = vcmp.lt.s32.totalorder %v118, 0
  %v129 = vsub.s32 0, %v118
  %v130 = vsel %vm128, %v129, %v118
  %v131 = vshrl.u32 %v130, 1
  %v132 = vand.u32 %v130, 1
  %v133 = vsub.s32 0, %v132
  %v134 = vsel %vm128, %v133, %v132
  %vm135 = vcmp.ne.s32.totalorder %v127, 0
  %vm136 = vcmp.ne.s32.totalorder %v134, 0
  %vm137 = vcmp.lt.s32.totalorder %v127, 0
  %vm138 = vcmp.lt.s32.totalorder %v134, 0
  %vm139 = vmand %vm137, %vm135
  %vm140 = vmand %vm138, %vm136
  %v141 = vadd.s32 %v127, 2
  %v142 = vadd.s32 %v134, 2
  %v143 = vsel %vm139, %v141, %v127
  %v144 = vsel %vm140, %v142, %v134
  %vm145 = vcmp.lt.s32.totalorder %v120, 0
  %v146 = vsub.s32 0, %v120
  %v147 = vsel %vm145, %v146, %v120
  %v148 = vshrl.u32 %v147, 1
  %v149 = vand.u32 %v147, 1
  %v150 = vsub.s32 0, %v149
  %v151 = vsel %vm145, %v150, %v149
  %vm152 = vcmp.ne.s32.totalorder %v151, 0
  %vm153 = vcmp.lt.s32.totalorder %v151, 0
  %vm154 = vmand %vm153, %vm152
  %v155 = vadd.s32 %v151, 2
  %v156 = vsel %vm154, %v155, %v151
  %vm157 = vcmp.eq.s32.totalorder %v143, %v156
  %vm158 = vcmp.eq.s32.totalorder %v144, %v156
  %v159 = vsel %vm157, 0.35355338, 0.0
  %v160 = vsel %vm158, 0.35355338, 0.0
  %163 = vrot.lane.b32.xlu0 %v111, 96
  %v164 = vpop.permute.xlu0 %163
  %165 = vrot.lane.b32.xlu0 %v114, 96
  %v166 = vpop.permute.xlu0 %165
  %vm167 = vcmask 64512
  %v168 = vsel %vm167, %v111, 0
  %v170 = vsel %vm167, %v114, 0
  %v172 = vsel %vm167, %v164, 0
  %v174 = vsel %vm167, %v166, 0
  %176 = vmatpush.xpose.msra.mxu0 0.0
  %177 = vmatpush.xpose.msra.mxu0 0.0
  %178 = vmatpush.xpose.msra.mxu0 0.0
  %179 = vmatpush.xpose.msra.mxu0 0.0
  %180 = vmatpush.xpose.msra.mxu0 0.0
  %181 = vmatpush.xpose.msra.mxu0 0.0
  %182 = vmatpush.xpose.msra.mxu0 0.0
  %183 = vmatpush.xpose.msra.mxu0 0.0
  %184 = vmatpush.xpose.msra.mxu0 0.0
  %185 = vmatpush.xpose.msra.mxu0 0.0
  %186 = vmatpush.xpose.msra.mxu0 0.0
  %187 = vmatpush.xpose.msra.mxu0 0.0
  %188 = vmatpush.xpose.msra.mxu0 0.0
  %189 = vmatpush.xpose.msra.mxu0 0.0
  %190 = vmatpush.xpose.msra.mxu0 %v174
  %191 = vmatpush.xpose.msra.mxu0 %v172
  %192 = vmatmul.f32.gmra.mxu0 %v168
  %v193 = vpop.f32.mrf.mxu0
  %v194 = vadd.f32 0.0, %v193
  %195 = vmatmul.f32.gmra.mxu0 %v170
  %v196 = vpop.f32.mrf.mxu0
  %v197 = vadd.f32 0.0, %v196
  %198 = vdwg.mxu0
  %v199 = vmul.f32 %v194, %v159
  %v200 = vmul.f32 %v197, %v160
  %201 = vrot.lane.b32.xlu0 %v111, 64
  %v202 = vpop.permute.xlu0 %201
  %203 = vrot.lane.b32.xlu0 %v114, 64
  %v204 = vpop.permute.xlu0 %203
  %vm207 = vcmask 130048
  %v209 = vsel %vm207, %v199, 0
  %v212 = vsel %vm207, %v200, 0
  %214 = vmatpush.msra.mxu0 0.0
  %215 = vmatpush.msra.mxu0 0.0
  %216 = vmatpush.msra.mxu0 0.0
  %217 = vmatpush.msra.mxu0 0.0
  %218 = vmatpush.msra.mxu0 0.0
  %219 = vmatpush.msra.mxu0 0.0
  %220 = vmatpush.msra.mxu0 0.0
  %221 = vmatpush.msra.mxu0 0.0
  %222 = vmatpush.msra.mxu0 0.0
  %223 = vmatpush.msra.mxu0 0.0
  %224 = vmatpush.msra.mxu0 0.0
  %225 = vmatpush.msra.mxu0 0.0
  %226 = vmatpush.msra.mxu0 0.0
  %227 = vmatpush.msra.mxu0 0.0
  %228 = vmatpush.msra.mxu0 %v204
  %229 = vmatpush.msra.mxu0 %v202
  %230 = vmatmul.f32.gmra.mxu0 %v209
  %v231 = vpop.f32.mrf.mxu0
  %v232 = vadd.f32 0.0, %v231
  %233 = vmatmul.f32.gmra.mxu0 %v212
  %v234 = vpop.f32.mrf.mxu0
  %v235 = vadd.f32 0.0, %v234
  %236 = vdwg.mxu0
  %237 = vrot.lane.b32.xlu0 %v111, 120
  %v238 = vpop.permute.xlu0 %237
  %239 = vrot.lane.b32.xlu0 %v114, 120
  %v240 = vpop.permute.xlu0 %239
  %241 = vrot.lane.b32.xlu0 %v111, 88
  %v242 = vpop.permute.xlu0 %241
  %243 = vrot.lane.b32.xlu0 %v114, 88
  %v244 = vpop.permute.xlu0 %243
  %v245 = vsel %vm167, %v238, 0
  %v247 = vsel %vm167, %v240, 0
  %v249 = vsel %vm167, %v242, 0
  %v251 = vsel %vm167, %v244, 0
  %253 = vmatpush.xpose.msra.mxu0 0.0
  %254 = vmatpush.xpose.msra.mxu0 0.0
  %255 = vmatpush.xpose.msra.mxu0 0.0
  %256 = vmatpush.xpose.msra.mxu0 0.0
  %257 = vmatpush.xpose.msra.mxu0 0.0
  %258 = vmatpush.xpose.msra.mxu0 0.0
  %259 = vmatpush.xpose.msra.mxu0 0.0
  %260 = vmatpush.xpose.msra.mxu0 0.0
  %261 = vmatpush.xpose.msra.mxu0 0.0
  %262 = vmatpush.xpose.msra.mxu0 0.0
  %263 = vmatpush.xpose.msra.mxu0 0.0
  %264 = vmatpush.xpose.msra.mxu0 0.0
  %265 = vmatpush.xpose.msra.mxu0 0.0
  %266 = vmatpush.xpose.msra.mxu0 0.0
  %267 = vmatpush.xpose.msra.mxu0 %v251
  %268 = vmatpush.xpose.msra.mxu0 %v249
  %269 = vmatmul.f32.gmra.mxu0 %v245
  %v270 = vpop.f32.mrf.mxu0
  %v271 = vadd.f32 0.0, %v270
  %272 = vmatmul.f32.gmra.mxu0 %v247
  %v273 = vpop.f32.mrf.mxu0
  %v274 = vadd.f32 0.0, %v273
  %275 = vdwg.mxu0
  %v276 = vmul.f32 %v271, %v159
  %v277 = vmul.f32 %v274, %v160
  %278 = vrot.lane.b32.xlu0 %v111, 56
  %v279 = vpop.permute.xlu0 %278
  %280 = vrot.lane.b32.xlu0 %v114, 56
  %v281 = vpop.permute.xlu0 %280
  %v285 = vsel %vm207, %v276, 0
  %v288 = vsel %vm207, %v277, 0
  %290 = vmatpush.msra.mxu0 0.0
  %291 = vmatpush.msra.mxu0 0.0
  %292 = vmatpush.msra.mxu0 0.0
  %293 = vmatpush.msra.mxu0 0.0
  %294 = vmatpush.msra.mxu0 0.0
  %295 = vmatpush.msra.mxu0 0.0
  %296 = vmatpush.msra.mxu0 0.0
  %297 = vmatpush.msra.mxu0 0.0
  %298 = vmatpush.msra.mxu0 0.0
  %299 = vmatpush.msra.mxu0 0.0
  %300 = vmatpush.msra.mxu0 0.0
  %301 = vmatpush.msra.mxu0 0.0
  %302 = vmatpush.msra.mxu0 0.0
  %303 = vmatpush.msra.mxu0 0.0
  %304 = vmatpush.msra.mxu0 %v281
  %305 = vmatpush.msra.mxu0 %v279
  %306 = vmatmul.f32.gmra.mxu0 %v285
  %v307 = vpop.f32.mrf.mxu0
  %v308 = vadd.f32 0.0, %v307
  %309 = vmatmul.f32.gmra.mxu0 %v288
  %v310 = vpop.f32.mrf.mxu0
  %v311 = vadd.f32 0.0, %v310
  %312 = vdwg.mxu0
  %313 = vrot.lane.b32.xlu0 %v111, 112
  %v314 = vpop.permute.xlu0 %313
  %315 = vrot.lane.b32.xlu0 %v114, 112
  %v316 = vpop.permute.xlu0 %315
  %317 = vrot.lane.b32.xlu0 %v111, 80
  %v318 = vpop.permute.xlu0 %317
  %319 = vrot.lane.b32.xlu0 %v114, 80
  %v320 = vpop.permute.xlu0 %319
  %v321 = vsel %vm167, %v314, 0
  %v323 = vsel %vm167, %v316, 0
  %v325 = vsel %vm167, %v318, 0
  %v327 = vsel %vm167, %v320, 0
  %329 = vmatpush.xpose.msra.mxu0 0.0
  %330 = vmatpush.xpose.msra.mxu0 0.0
  %331 = vmatpush.xpose.msra.mxu0 0.0
  %332 = vmatpush.xpose.msra.mxu0 0.0
  %333 = vmatpush.xpose.msra.mxu0 0.0
  %334 = vmatpush.xpose.msra.mxu0 0.0
  %335 = vmatpush.xpose.msra.mxu0 0.0
  %336 = vmatpush.xpose.msra.mxu0 0.0
  %337 = vmatpush.xpose.msra.mxu0 0.0
  %338 = vmatpush.xpose.msra.mxu0 0.0
  %339 = vmatpush.xpose.msra.mxu0 0.0
  %340 = vmatpush.xpose.msra.mxu0 0.0
  %341 = vmatpush.xpose.msra.mxu0 0.0
  %342 = vmatpush.xpose.msra.mxu0 0.0
  %343 = vmatpush.xpose.msra.mxu0 %v327
  %344 = vmatpush.xpose.msra.mxu0 %v325
  %345 = vmatmul.f32.gmra.mxu0 %v321
  %v346 = vpop.f32.mrf.mxu0
  %v347 = vadd.f32 0.0, %v346
  %348 = vmatmul.f32.gmra.mxu0 %v323
  %v349 = vpop.f32.mrf.mxu0
  %v350 = vadd.f32 0.0, %v349
  %351 = vdwg.mxu0
  %v352 = vmul.f32 %v347, %v159
  %v353 = vmul.f32 %v350, %v160
  %354 = vrot.lane.b32.xlu0 %v111, 48
  %v355 = vpop.permute.xlu0 %354
  %356 = vrot.lane.b32.xlu0 %v114, 48
  %v357 = vpop.permute.xlu0 %356
  %v361 = vsel %vm207, %v352, 0
  %v364 = vsel %vm207, %v353, 0
  %366 = vmatpush.msra.mxu0 0.0
  %367 = vmatpush.msra.mxu0 0.0
  %368 = vmatpush.msra.mxu0 0.0
  %369 = vmatpush.msra.mxu0 0.0
  %370 = vmatpush.msra.mxu0 0.0
  %371 = vmatpush.msra.mxu0 0.0
  %372 = vmatpush.msra.mxu0 0.0
  %373 = vmatpush.msra.mxu0 0.0
  %374 = vmatpush.msra.mxu0 0.0
  %375 = vmatpush.msra.mxu0 0.0
  %376 = vmatpush.msra.mxu0 0.0
  %377 = vmatpush.msra.mxu0 0.0
  %378 = vmatpush.msra.mxu0 0.0
  %379 = vmatpush.msra.mxu0 0.0
  %380 = vmatpush.msra.mxu0 %v357
  %381 = vmatpush.msra.mxu0 %v355
  %382 = vmatmul.f32.gmra.mxu0 %v361
  %v383 = vpop.f32.mrf.mxu0
  %v384 = vadd.f32 0.0, %v383
  %385 = vmatmul.f32.gmra.mxu0 %v364
  %v386 = vpop.f32.mrf.mxu0
  %v387 = vadd.f32 0.0, %v386
  %388 = vdwg.mxu0
  %389 = vrot.lane.b32.xlu0 %v111, 104
  %v390 = vpop.permute.xlu0 %389
  %391 = vrot.lane.b32.xlu0 %v114, 104
  %v392 = vpop.permute.xlu0 %391
  %393 = vrot.lane.b32.xlu0 %v111, 72
  %v394 = vpop.permute.xlu0 %393
  %395 = vrot.lane.b32.xlu0 %v114, 72
  %v396 = vpop.permute.xlu0 %395
  %v397 = vsel %vm167, %v390, 0
  %v399 = vsel %vm167, %v392, 0
  %v401 = vsel %vm167, %v394, 0
  %v403 = vsel %vm167, %v396, 0
  %405 = vmatpush.xpose.msra.mxu0 0.0
  %406 = vmatpush.xpose.msra.mxu0 0.0
  %407 = vmatpush.xpose.msra.mxu0 0.0
  %408 = vmatpush.xpose.msra.mxu0 0.0
  %409 = vmatpush.xpose.msra.mxu0 0.0
  %410 = vmatpush.xpose.msra.mxu0 0.0
  %411 = vmatpush.xpose.msra.mxu0 0.0
  %412 = vmatpush.xpose.msra.mxu0 0.0
  %413 = vmatpush.xpose.msra.mxu0 0.0
  %414 = vmatpush.xpose.msra.mxu0 0.0
  %415 = vmatpush.xpose.msra.mxu0 0.0
  %416 = vmatpush.xpose.msra.mxu0 0.0
  %417 = vmatpush.xpose.msra.mxu0 0.0
  %418 = vmatpush.xpose.msra.mxu0 0.0
  %419 = vmatpush.xpose.msra.mxu0 %v403
  %420 = vmatpush.xpose.msra.mxu0 %v401
  %421 = vmatmul.f32.gmra.mxu0 %v397
  %v422 = vpop.f32.mrf.mxu0
  %v423 = vadd.f32 0.0, %v422
  %424 = vmatmul.f32.gmra.mxu0 %v399
  %v425 = vpop.f32.mrf.mxu0
  %v426 = vadd.f32 0.0, %v425
  %427 = vdwg.mxu0
  %v428 = vmul.f32 %v423, %v159
  %v429 = vmul.f32 %v426, %v160
  %430 = vrot.lane.b32.xlu0 %v111, 40
  %v431 = vpop.permute.xlu0 %430
  %432 = vrot.lane.b32.xlu0 %v114, 40
  %v433 = vpop.permute.xlu0 %432
  %v437 = vsel %vm207, %v428, 0
  %v440 = vsel %vm207, %v429, 0
  %442 = vmatpush.msra.mxu0 0.0
  %443 = vmatpush.msra.mxu0 0.0
  %444 = vmatpush.msra.mxu0 0.0
  %445 = vmatpush.msra.mxu0 0.0
  %446 = vmatpush.msra.mxu0 0.0
  %447 = vmatpush.msra.mxu0 0.0
  %448 = vmatpush.msra.mxu0 0.0
  %449 = vmatpush.msra.mxu0 0.0
  %450 = vmatpush.msra.mxu0 0.0
  %451 = vmatpush.msra.mxu0 0.0
  %452 = vmatpush.msra.mxu0 0.0
  %453 = vmatpush.msra.mxu0 0.0
  %454 = vmatpush.msra.mxu0 0.0
  %455 = vmatpush.msra.mxu0 0.0
  %456 = vmatpush.msra.mxu0 %v433
  %457 = vmatpush.msra.mxu0 %v431
  %458 = vmatmul.f32.gmra.mxu0 %v437
  %v459 = vpop.f32.mrf.mxu0
  %v460 = vadd.f32 0.0, %v459
  %461 = vmatmul.f32.gmra.mxu0 %v440
  %v462 = vpop.f32.mrf.mxu0
  %v463 = vadd.f32 0.0, %v462
  %464 = vdwg.mxu0
  %467 = vrot.lane.b32.xlu0 %v308, 8
  %v468 = vpop.permute.xlu0 %467
  %469 = vrot.lane.b32.xlu0 %v311, 8
  %v470 = vpop.permute.xlu0 %469
  %475 = vrot.lane.b32.xlu0 %v384, 16
  %v476 = vpop.permute.xlu0 %475
  %477 = vrot.lane.b32.xlu0 %v387, 16
  %v478 = vpop.permute.xlu0 %477
  %483 = vrot.lane.b32.xlu0 %v460, 24
  %v484 = vpop.permute.xlu0 %483
  %485 = vrot.lane.b32.xlu0 %v463, 24
  %v486 = vpop.permute.xlu0 %485
  %v489 = vsel %vm167, %v232, %v468
  %v490 = vsel %vm167, %v235, %v470
  %v491 = vsel %vm207, %v489, %v476
  %v492 = vsel %vm207, %v490, %v478
  %vm493 = vcmask 195584
  %v494 = vsel %vm493, %v491, %v484
  %v495 = vsel %vm493, %v492, %v486
  %v497 = vsel %vm86, %v494, 0
  %v500 = vsel %vm86, %v495, 0
  %502 = vmatpush.msra.mxu0 0.0
  %503 = vmatpush.msra.mxu0 0.0
  %504 = vmatpush.msra.mxu0 0.0
  %505 = vmatpush.msra.mxu0 0.0
  %506 = vmatpush.msra.mxu0 0.0
  %507 = vmatpush.msra.mxu0 0.0
  %508 = vmatpush.msra.mxu0 0.0
  %509 = vmatpush.msra.mxu0 0.0
  %510 = vmatpush.msra.mxu0 0.0
  %511 = vmatpush.msra.mxu0 0.0
  %512 = vmatpush.msra.mxu0 0.0
  %513 = vmatpush.msra.mxu0 0.0
  %514 = vmatpush.msra.mxu0 %v25
  %515 = vmatpush.msra.mxu0 %v24
  %516 = vmatpush.msra.mxu0 %v23
  %517 = vmatpush.msra.mxu0 %v22
  %518 = vmatmul.f32.gmra.mxu0 %v497
  %v519 = vpop.f32.mrf.mxu0
  %v520 = vadd.f32 %v48, %v519
  %521 = vmatmul.f32.gmra.mxu0 %v500
  %v522 = vpop.f32.mrf.mxu0
  %v523 = vadd.f32 %v48, %v522
  %524 = vdwg.mxu0
  %v525 = vadd.f32 %v84, %v520
  %v526 = vadd.f32 %v85, %v523
  %v527 = vsel %vm86, %v525, 0.0
  %528 = vadd.xlane.f32.xlu0 %v527
  %v529 = vpop.xlane.xlu0 %528
  %v530 = vsel %vm86, %v526, 0.0
  %531 = vadd.xlane.f32.xlu0 %v530
  %v532 = vpop.xlane.xlu0 %531
  %v533 = vrcp.pop 32.0
  %v534 = vmul.f32 32.0, %v533
  %v535 = vsub.f32 1.0, %v534
  %v536 = vmul.f32 %v533, %v535
  %v537 = vadd.f32 %v533, %v536
  %vm538 = vweird.f32 %v533
  %v539 = vsel %vm538, %v533, %v537
  %v540 = vmul.f32 %v529, %v539
  %v541 = vmul.f32 %v532, %v539
  %v542 = vsub.f32 %v525, %v540
  %v543 = vsub.f32 %v526, %v541
  %v544 = vmul.f32 %v542, %v542
  %v545 = vmul.f32 %v543, %v543
  %v546 = vsel %vm86, %v544, 0.0
  %547 = vadd.xlane.f32.xlu0 %v546
  %v548 = vpop.xlane.xlu0 %547
  %v549 = vsel %vm86, %v545, 0.0
  %550 = vadd.xlane.f32.xlu0 %v549
  %v551 = vpop.xlane.xlu0 %550
  %v552 = vmul.f32 %v548, 0.032258064
  %v553 = vmul.f32 %v551, 0.032258064
  %556 = vrot.lane.b32.xlu0 %v542, 32
  %v557 = vpop.permute.xlu0 %556
  %558 = vrot.lane.b32.xlu0 %v543, 32
  %v559 = vpop.permute.xlu0 %558
  %v562 = vmul.f32 %v48, %v557
  %v563 = vmul.f32 %v48, %v559
  %v564 = vrsqrt.pop %v552
  %v565 = vmul.f32 %v564, %v552
  %v566 = vmul.f32 %v565, %v564
  %v567 = vmul.f32 0.5, %v566
  %v568 = vsub.f32 1.5, %v567
  %v569 = vmul.f32 %v564, %v568
  %v570 = vmul.f32 %v552, %v569
  %vm571 = vcmp.eq.f32.partialorder %v552, inf
  %v572 = vsel %vm571, %v552, %v570
  %vm573 = vcmp.eq.f32.partialorder %v552, 0.0
  %v574 = vand.u32 %v552, 2147483648
  %v575 = vsel %vm573, %v574, %v572
  %v576 = vrsqrt.pop %v553
  %v577 = vmul.f32 %v576, %v553
  %v578 = vmul.f32 %v577, %v576
  %v579 = vmul.f32 0.5, %v578
  %v580 = vsub.f32 1.5, %v579
  %v581 = vmul.f32 %v576, %v580
  %v582 = vmul.f32 %v553, %v581
  %vm583 = vcmp.eq.f32.partialorder %v553, inf
  %v584 = vsel %vm583, %v553, %v582
  %vm585 = vcmp.eq.f32.partialorder %v553, 0.0
  %v586 = vand.u32 %v553, 2147483648
  %v587 = vsel %vm585, %v586, %v584
  %v588 = vadd.f32 %v575, 1e-06
  %v589 = vadd.f32 %v587, 1e-06
  %v590 = vrcp.pop %v588
  %v591 = vmul.f32 %v588, %v590
  %v592 = vsub.f32 1.0, %v591
  %v593 = vmul.f32 %v590, %v592
  %v594 = vadd.f32 %v590, %v593
  %vm595 = vweird.f32 %v588
  %vm596 = vweird.f32 %v590
  %vm597 = vmor %vm595, %vm596
  %v598 = vsel %vm597, %v590, %v594
  %v599 = vand.u32 2147483647, %v588
  %vm600 = vcmp.eq.f32.partialorder %v599, 8.507059e+37
  %v601 = vand.u32 %v588, 2147483648
  %v602 = vor.u32 1.1754944e-38, %v601
  %v603 = vsel %vm600, %v602, %v598
  %v604 = vmul.f32 %v562, %v603
  %v605 = vrcp.pop %v589
  %v606 = vmul.f32 %v589, %v605
  %v607 = vsub.f32 1.0, %v606
  %v608 = vmul.f32 %v605, %v607
  %v609 = vadd.f32 %v605, %v608
  %vm610 = vweird.f32 %v589
  %vm611 = vweird.f32 %v605
  %vm612 = vmor %vm610, %vm611
  %v613 = vsel %vm612, %v605, %v609
  %v614 = vand.u32 2147483647, %v589
  %vm615 = vcmp.eq.f32.partialorder %v614, 8.507059e+37
  %v616 = vand.u32 %v589, 2147483648
  %v617 = vor.u32 1.1754944e-38, %v616
  %v618 = vsel %vm615, %v617, %v613
  %v619 = vmul.f32 %v563, %v618
  %621 = vrot.lane.b32.xlu0 %v48, 96
  %v622 = vpop.permute.xlu0 %621
  %v624 = vadd.f32 %v604, %v622
  %v625 = vadd.f32 %v619, %v622
  %v627 = vsel %vm86, %v525, 0
  %v630 = vsel %vm86, %v526, 0
  %632 = vmatpush.msra.mxu0 0.0
  %633 = vmatpush.msra.mxu0 0.0
  %634 = vmatpush.msra.mxu0 0.0
  %635 = vmatpush.msra.mxu0 0.0
  %636 = vmatpush.msra.mxu0 0.0
  %637 = vmatpush.msra.mxu0 0.0
  %638 = vmatpush.msra.mxu0 0.0
  %639 = vmatpush.msra.mxu0 0.0
  %640 = vmatpush.msra.mxu0 0.0
  %641 = vmatpush.msra.mxu0 0.0
  %642 = vmatpush.msra.mxu0 0.0
  %643 = vmatpush.msra.mxu0 0.0
  %644 = vmatpush.msra.mxu0 %v21
  %645 = vmatpush.msra.mxu0 %v20
  %646 = vmatpush.msra.mxu0 %v19
  %647 = vmatpush.msra.mxu0 %v18
  %648 = vmatmul.f32.gmra.mxu0 %v627
  %v649 = vpop.f32.mrf.mxu0
  %v650 = vadd.f32 %v47, %v649
  %651 = vmatmul.f32.gmra.mxu0 %v630
  %v652 = vpop.f32.mrf.mxu0
  %v653 = vadd.f32 %v47, %v652
  %654 = vdwg.mxu0
  %v655 = vmax.f32 %v650, 0.0
  %v656 = vmax.f32 %v653, 0.0
  %658 = vrot.lane.b32.xlu0 %v49, 64
  %v659 = vpop.permute.xlu0 %658
  %vm661 = vcmask 523264
  %v663 = vsel %vm661, %v655, 0
  %v666 = vsel %vm661, %v656, 0
  %668 = vmatpush.msra.mxu0 0.0
  %669 = vmatpush.msra.mxu0 0.0
  %670 = vmatpush.msra.mxu0 0.0
  %671 = vmatpush.msra.mxu0 0.0
  %672 = vmatpush.msra.mxu0 0.0
  %673 = vmatpush.msra.mxu0 0.0
  %674 = vmatpush.msra.mxu0 0.0
  %675 = vmatpush.msra.mxu0 0.0
  %676 = vmatpush.msra.mxu0 %v37
  %677 = vmatpush.msra.mxu0 %v36
  %678 = vmatpush.msra.mxu0 %v35
  %679 = vmatpush.msra.mxu0 %v34
  %680 = vmatpush.msra.mxu0 %v33
  %681 = vmatpush.msra.mxu0 %v32
  %682 = vmatpush.msra.mxu0 %v31
  %683 = vmatpush.msra.mxu0 %v30
  %684 = vmatmul.f32.gmra.mxu0 %v663
  %v685 = vpop.f32.mrf.mxu0
  %v686 = vadd.f32 %v659, %v685
  %687 = vmatmul.f32.gmra.mxu0 %v666
  %v688 = vpop.f32.mrf.mxu0
  %v689 = vadd.f32 %v659, %v688
  %690 = vdwg.mxu0
  %693 = vrot.lane.b32.xlu0 %v686, 32
  %v694 = vpop.permute.xlu0 %693
  %695 = vrot.lane.b32.xlu0 %v689, 32
  %v696 = vpop.permute.xlu0 %695
  %v699 = vadd.f32 %v624, %v694
  %v700 = vadd.f32 %v625, %v696
  %v701 = vld [vmem:[%s1] sm:$0xff]
  %v702 = vld [vmem:[%s1 + $0x8] sm:$0xff]
  %705 = vrot.lane.b32.xlu0 %v699, 96
  %v706 = vpop.permute.xlu0 %705
  %707 = vrot.lane.b32.xlu0 %v700, 96
  %v708 = vpop.permute.xlu0 %707
  %v709 = vsel %vm86, %v706, 0
  %v711 = vsel %vm86, %v708, 0
  %713 = vmatpush.msra.mxu0 0.0
  %714 = vmatpush.msra.mxu0 0.0
  %715 = vmatpush.msra.mxu0 0.0
  %716 = vmatpush.msra.mxu0 0.0
  %717 = vmatpush.msra.mxu0 0.0
  %718 = vmatpush.msra.mxu0 0.0
  %719 = vmatpush.msra.mxu0 0.0
  %720 = vmatpush.msra.mxu0 0.0
  %721 = vmatpush.msra.mxu0 0.0
  %722 = vmatpush.msra.mxu0 0.0
  %723 = vmatpush.msra.mxu0 0.0
  %724 = vmatpush.msra.mxu0 0.0
  %725 = vmatpush.msra.mxu0 %v64
  %726 = vmatpush.msra.mxu0 %v62
  %727 = vmatpush.msra.mxu0 %v60
  %728 = vmatpush.msra.mxu0 %v58
  %729 = vmatmul.f32.gmra.mxu0 %v709
  %v730 = vpop.f32.mrf.mxu0
  %v731 = vadd.f32 0.0, %v730
  %732 = vmatmul.f32.gmra.mxu0 %v711
  %v733 = vpop.f32.mrf.mxu0
  %v734 = vadd.f32 0.0, %v733
  %735 = vdwg.mxu0
  %736 = vmatpush.msra.mxu0 0.0
  %737 = vmatpush.msra.mxu0 0.0
  %738 = vmatpush.msra.mxu0 0.0
  %739 = vmatpush.msra.mxu0 0.0
  %740 = vmatpush.msra.mxu0 0.0
  %741 = vmatpush.msra.mxu0 0.0
  %742 = vmatpush.msra.mxu0 0.0
  %743 = vmatpush.msra.mxu0 0.0
  %744 = vmatpush.msra.mxu0 0.0
  %745 = vmatpush.msra.mxu0 0.0
  %746 = vmatpush.msra.mxu0 0.0
  %747 = vmatpush.msra.mxu0 0.0
  %748 = vmatpush.msra.mxu0 %v65
  %749 = vmatpush.msra.mxu0 %v63
  %750 = vmatpush.msra.mxu0 %v61
  %751 = vmatpush.msra.mxu0 %v59
  %752 = vmatmul.f32.gmra.mxu0 %v709
  %v753 = vpop.f32.mrf.mxu0
  %v754 = vadd.f32 0.0, %v753
  %755 = vmatmul.f32.gmra.mxu0 %v711
  %v756 = vpop.f32.mrf.mxu0
  %v757 = vadd.f32 0.0, %v756
  %758 = vdwg.mxu0
  %v760 = vsel %vm86, %v701, 0
  %v763 = vsel %vm86, %v702, 0
  %765 = vmatpush.msra.mxu0 0.0
  %766 = vmatpush.msra.mxu0 0.0
  %767 = vmatpush.msra.mxu0 0.0
  %768 = vmatpush.msra.mxu0 0.0
  %769 = vmatpush.msra.mxu0 0.0
  %770 = vmatpush.msra.mxu0 0.0
  %771 = vmatpush.msra.mxu0 0.0
  %772 = vmatpush.msra.mxu0 0.0
  %773 = vmatpush.msra.mxu0 0.0
  %774 = vmatpush.msra.mxu0 0.0
  %775 = vmatpush.msra.mxu0 0.0
  %776 = vmatpush.msra.mxu0 0.0
  %777 = vmatpush.msra.mxu0 %v56
  %778 = vmatpush.msra.mxu0 %v54
  %779 = vmatpush.msra.mxu0 %v52
  %780 = vmatpush.msra.mxu0 %v50
  %781 = vmatmul.f32.gmra.mxu0 %v760
  %v782 = vpop.f32.mrf.mxu0
  %v783 = vadd.f32 %v731, %v782
  %784 = vmatmul.f32.gmra.mxu0 %v763
  %v785 = vpop.f32.mrf.mxu0
  %v786 = vadd.f32 %v734, %v785
  %787 = vdwg.mxu0
  %788 = vmatpush.msra.mxu0 0.0
  %789 = vmatpush.msra.mxu0 0.0
  %790 = vmatpush.msra.mxu0 0.0
  %791 = vmatpush.msra.mxu0 0.0
  %792 = vmatpush.msra.mxu0 0.0
  %793 = vmatpush.msra.mxu0 0.0
  %794 = vmatpush.msra.mxu0 0.0
  %795 = vmatpush.msra.mxu0 0.0
  %796 = vmatpush.msra.mxu0 0.0
  %797 = vmatpush.msra.mxu0 0.0
  %798 = vmatpush.msra.mxu0 0.0
  %799 = vmatpush.msra.mxu0 0.0
  %800 = vmatpush.msra.mxu0 %v57
  %801 = vmatpush.msra.mxu0 %v55
  %802 = vmatpush.msra.mxu0 %v53
  %803 = vmatpush.msra.mxu0 %v51
  %804 = vmatmul.f32.gmra.mxu0 %v760
  %v805 = vpop.f32.mrf.mxu0
  %v806 = vadd.f32 %v754, %v805
  %807 = vmatmul.f32.gmra.mxu0 %v763
  %v808 = vpop.f32.mrf.mxu0
  %v809 = vadd.f32 %v757, %v808
  %810 = vdwg.mxu0
  %v812 = vperm.slane %v83, 0
  %v813 = vperm.slane %v83, 1
  %v816 = vadd.f32 %v783, %v812
  %v817 = vadd.f32 %v806, %v813
  %v818 = vadd.f32 %v786, %v812
  %v819 = vadd.f32 %v809, %v813
  %v821 = vsel %vm661, 0.0, 0
  %823 = vmatpush.msra.mxu0 0.0
  %824 = vmatpush.msra.mxu0 0.0
  %825 = vmatpush.msra.mxu0 0.0
  %826 = vmatpush.msra.mxu0 0.0
  %827 = vmatpush.msra.mxu0 0.0
  %828 = vmatpush.msra.mxu0 0.0
  %829 = vmatpush.msra.mxu0 0.0
  %830 = vmatpush.msra.mxu0 0.0
  %831 = vmatpush.msra.mxu0 %v80
  %832 = vmatpush.msra.mxu0 %v78
  %833 = vmatpush.msra.mxu0 %v76
  %834 = vmatpush.msra.mxu0 %v74
  %835 = vmatpush.msra.mxu0 %v72
  %836 = vmatpush.msra.mxu0 %v70
  %837 = vmatpush.msra.mxu0 %v68
  %838 = vmatpush.msra.mxu0 %v66
  %839 = vmatmul.f32.gmra.mxu0 %v821
  %v840 = vpop.f32.mrf.mxu0
  %v841 = vadd.f32 0.0, %v840
  %842 = vdwg.mxu0
  %843 = vmatpush.msra.mxu0 0.0
  %844 = vmatpush.msra.mxu0 0.0
  %845 = vmatpush.msra.mxu0 0.0
  %846 = vmatpush.msra.mxu0 0.0
  %847 = vmatpush.msra.mxu0 0.0
  %848 = vmatpush.msra.mxu0 0.0
  %849 = vmatpush.msra.mxu0 0.0
  %850 = vmatpush.msra.mxu0 0.0
  %851 = vmatpush.msra.mxu0 %v81
  %852 = vmatpush.msra.mxu0 %v79
  %853 = vmatpush.msra.mxu0 %v77
  %854 = vmatpush.msra.mxu0 %v75
  %855 = vmatpush.msra.mxu0 %v73
  %856 = vmatpush.msra.mxu0 %v71
  %857 = vmatpush.msra.mxu0 %v69
  %858 = vmatpush.msra.mxu0 %v67
  %859 = vmatmul.f32.gmra.mxu0 %v821
  %v860 = vpop.f32.mrf.mxu0
  %v861 = vadd.f32 0.0, %v860
  %862 = vdwg.mxu0
  %v863 = vadd.f32 %v816, %v841
  %v864 = vadd.f32 %v817, %v861
  %v865 = vxor.u32 %v863, 2147483648
  %v866 = vxor.u32 %v864, 2147483648
  %v867 = vmul.f32 %v865, 1.442695
  %v868 = vpow.pop %v867
  %v869 = vmul.f32 %v866, 1.442695
  %v870 = vpow.pop %v869
  %v871 = vadd.f32 %v868, 1.0
  %v872 = vadd.f32 %v870, 1.0
  %v873 = vrcp.pop %v871
  %v874 = vmul.f32 %v871, %v873
  %v875 = vsub.f32 1.0, %v874
  %v876 = vmul.f32 %v873, %v875
  %v877 = vadd.f32 %v873, %v876
  %vm878 = vweird.f32 %v871
  %vm879 = vweird.f32 %v873
  %vm880 = vmor %vm878, %vm879
  %v881 = vsel %vm880, %v873, %v877
  %v882 = vand.u32 2147483647, %v871
  %vm883 = vcmp.eq.f32.partialorder %v882, 8.507059e+37
  %v884 = vand.u32 %v871, 2147483648
  %v885 = vor.u32 1.1754944e-38, %v884
  %v886 = vsel %vm883, %v885, %v881
  %v887 = vmul.f32 1.0, %v886
  %v888 = vrcp.pop %v872
  %v889 = vmul.f32 %v872, %v888
  %v890 = vsub.f32 1.0, %v889
  %v891 = vmul.f32 %v888, %v890
  %v892 = vadd.f32 %v888, %v891
  %vm893 = vweird.f32 %v872
  %vm894 = vweird.f32 %v888
  %vm895 = vmor %vm893, %vm894
  %v896 = vsel %vm895, %v888, %v892
  %v897 = vand.u32 2147483647, %v872
  %vm898 = vcmp.eq.f32.partialorder %v897, 8.507059e+37
  %v899 = vand.u32 %v872, 2147483648
  %v900 = vor.u32 1.1754944e-38, %v899
  %v901 = vsel %vm898, %v900, %v896
  %v902 = vmul.f32 1.0, %v901
  %v903 = vtanh.pop %v864
  %v904 = vmul.f32 %v887, 0.0
  %906 = vrot.lane.b32.xlu0 %v903, 64
  %v907 = vpop.permute.xlu0 %906
  %v909 = vmul.f32 %v887, %v907
  %911 = vrot.lane.b32.xlu0 %v909, 64
  %v912 = vpop.permute.xlu0 %911
  %v914 = vadd.f32 %v904, %v912
  %v915 = vtanh.pop %v914
  %917 = vrot.lane.b32.xlu0 %v915, 64
  %v918 = vpop.permute.xlu0 %917
  %v920 = vmul.f32 %v902, %v918
  %v922 = vsel %vm661, %v920, 0
  %924 = vmatpush.msra.mxu0 0.0
  %925 = vmatpush.msra.mxu0 0.0
  %926 = vmatpush.msra.mxu0 0.0
  %927 = vmatpush.msra.mxu0 0.0
  %928 = vmatpush.msra.mxu0 0.0
  %929 = vmatpush.msra.mxu0 0.0
  %930 = vmatpush.msra.mxu0 0.0
  %931 = vmatpush.msra.mxu0 0.0
  %932 = vmatpush.msra.mxu0 %v80
  %933 = vmatpush.msra.mxu0 %v78
  %934 = vmatpush.msra.mxu0 %v76
  %935 = vmatpush.msra.mxu0 %v74
  %936 = vmatpush.msra.mxu0 %v72
  %937 = vmatpush.msra.mxu0 %v70
  %938 = vmatpush.msra.mxu0 %v68
  %939 = vmatpush.msra.mxu0 %v66
  %940 = vmatmul.f32.gmra.mxu0 %v922
  %v941 = vpop.f32.mrf.mxu0
  %v942 = vadd.f32 0.0, %v941
  %943 = vdwg.mxu0
  %944 = vmatpush.msra.mxu0 0.0
  %945 = vmatpush.msra.mxu0 0.0
  %946 = vmatpush.msra.mxu0 0.0
  %947 = vmatpush.msra.mxu0 0.0
  %948 = vmatpush.msra.mxu0 0.0
  %949 = vmatpush.msra.mxu0 0.0
  %950 = vmatpush.msra.mxu0 0.0
  %951 = vmatpush.msra.mxu0 0.0
  %952 = vmatpush.msra.mxu0 %v81
  %953 = vmatpush.msra.mxu0 %v79
  %954 = vmatpush.msra.mxu0 %v77
  %955 = vmatpush.msra.mxu0 %v75
  %956 = vmatpush.msra.mxu0 %v73
  %957 = vmatpush.msra.mxu0 %v71
  %958 = vmatpush.msra.mxu0 %v69
  %959 = vmatpush.msra.mxu0 %v67
  %960 = vmatmul.f32.gmra.mxu0 %v922
  %v961 = vpop.f32.mrf.mxu0
  %v962 = vadd.f32 0.0, %v961
  %963 = vdwg.mxu0
  %v966 = vrot.slane %v942, 6
  %v967 = vrot.slane %v962, 6
  %v970 = vadd.f32 %v816, %v966
  %v971 = vadd.f32 %v817, %v967
  %v972 = vxor.u32 %v970, 2147483648
  %v973 = vxor.u32 %v971, 2147483648
  %v974 = vmul.f32 %v972, 1.442695
  %v975 = vpow.pop %v974
  %v976 = vmul.f32 %v973, 1.442695
  %v977 = vpow.pop %v976
  %v978 = vadd.f32 %v975, 1.0
  %v979 = vadd.f32 %v977, 1.0
  %v980 = vrcp.pop %v978
  %v981 = vmul.f32 %v978, %v980
  %v982 = vsub.f32 1.0, %v981
  %v983 = vmul.f32 %v980, %v982
  %v984 = vadd.f32 %v980, %v983
  %vm985 = vweird.f32 %v978
  %vm986 = vweird.f32 %v980
  %vm987 = vmor %vm985, %vm986
  %v988 = vsel %vm987, %v980, %v984
  %v989 = vand.u32 2147483647, %v978
  %vm990 = vcmp.eq.f32.partialorder %v989, 8.507059e+37
  %v991 = vand.u32 %v978, 2147483648
  %v992 = vor.u32 1.1754944e-38, %v991
  %v993 = vsel %vm990, %v992, %v988
  %v994 = vmul.f32 1.0, %v993
  %v995 = vrcp.pop %v979
  %v996 = vmul.f32 %v979, %v995
  %v997 = vsub.f32 1.0, %v996
  %v998 = vmul.f32 %v995, %v997
  %v999 = vadd.f32 %v995, %v998
  %vm1000 = vweird.f32 %v979
  %vm1001 = vweird.f32 %v995
  %vm1002 = vmor %vm1000, %vm1001
  %v1003 = vsel %vm1002, %v995, %v999
  %v1004 = vand.u32 2147483647, %v979
  %vm1005 = vcmp.eq.f32.partialorder %v1004, 8.507059e+37
  %v1006 = vand.u32 %v979, 2147483648
  %v1007 = vor.u32 1.1754944e-38, %v1006
  %v1008 = vsel %vm1005, %v1007, %v1003
  %v1009 = vmul.f32 1.0, %v1008
  %v1010 = vtanh.pop %v971
  %v1012 = vrot.slane %v914, 6
  %v1014 = vmul.f32 %v994, %v1012
  %1016 = vrot.lane.b32.xlu0 %v1010, 64
  %v1017 = vpop.permute.xlu0 %1016
  %v1019 = vmul.f32 %v994, %v1017
  %1021 = vrot.lane.b32.xlu0 %v1019, 64
  %v1022 = vpop.permute.xlu0 %1021
  %v1024 = vadd.f32 %v1014, %v1022
  %v1025 = vtanh.pop %v1024
  %1027 = vrot.lane.b32.xlu0 %v1025, 64
  %v1028 = vpop.permute.xlu0 %1027
  %v1030 = vmul.f32 %v1009, %v1028
  %v1032 = vrot.slane %v1030, 2
  %v1033 = vsel %vm661, %v1032, 0
  %1035 = vmatpush.msra.mxu0 0.0
  %1036 = vmatpush.msra.mxu0 0.0
  %1037 = vmatpush.msra.mxu0 0.0
  %1038 = vmatpush.msra.mxu0 0.0
  %1039 = vmatpush.msra.mxu0 0.0
  %1040 = vmatpush.msra.mxu0 0.0
  %1041 = vmatpush.msra.mxu0 0.0
  %1042 = vmatpush.msra.mxu0 0.0
  %1043 = vmatpush.msra.mxu0 %v80
  %1044 = vmatpush.msra.mxu0 %v78
  %1045 = vmatpush.msra.mxu0 %v76
  %1046 = vmatpush.msra.mxu0 %v74
  %1047 = vmatpush.msra.mxu0 %v72
  %1048 = vmatpush.msra.mxu0 %v70
  %1049 = vmatpush.msra.mxu0 %v68
  %1050 = vmatpush.msra.mxu0 %v66
  %1051 = vmatmul.f32.gmra.mxu0 %v1033
  %v1052 = vpop.f32.mrf.mxu0
  %v1053 = vadd.f32 0.0, %v1052
  %1054 = vdwg.mxu0
  %1055 = vmatpush.msra.mxu0 0.0
  %1056 = vmatpush.msra.mxu0 0.0
  %1057 = vmatpush.msra.mxu0 0.0
  %1058 = vmatpush.msra.mxu0 0.0
  %1059 = vmatpush.msra.mxu0 0.0
  %1060 = vmatpush.msra.mxu0 0.0
  %1061 = vmatpush.msra.mxu0 0.0
  %1062 = vmatpush.msra.mxu0 0.0
  %1063 = vmatpush.msra.mxu0 %v81
  %1064 = vmatpush.msra.mxu0 %v79
  %1065 = vmatpush.msra.mxu0 %v77
  %1066 = vmatpush.msra.mxu0 %v75
  %1067 = vmatpush.msra.mxu0 %v73
  %1068 = vmatpush.msra.mxu0 %v71
  %1069 = vmatpush.msra.mxu0 %v69
  %1070 = vmatpush.msra.mxu0 %v67
  %1071 = vmatmul.f32.gmra.mxu0 %v1033
  %v1072 = vpop.f32.mrf.mxu0
  %v1073 = vadd.f32 0.0, %v1072
  %1074 = vdwg.mxu0
  %v1077 = vrot.slane %v1053, 4
  %v1078 = vrot.slane %v1073, 4
  %v1081 = vadd.f32 %v816, %v1077
  %v1082 = vadd.f32 %v817, %v1078
  %v1083 = vxor.u32 %v1081, 2147483648
  %v1084 = vxor.u32 %v1082, 2147483648
  %v1085 = vmul.f32 %v1083, 1.442695
  %v1086 = vpow.pop %v1085
  %v1087 = vmul.f32 %v1084, 1.442695
  %v1088 = vpow.pop %v1087
  %v1089 = vadd.f32 %v1086, 1.0
  %v1090 = vadd.f32 %v1088, 1.0
  %v1091 = vrcp.pop %v1089
  %v1092 = vmul.f32 %v1089, %v1091
  %v1093 = vsub.f32 1.0, %v1092
  %v1094 = vmul.f32 %v1091, %v1093
  %v1095 = vadd.f32 %v1091, %v1094
  %vm1096 = vweird.f32 %v1089
  %vm1097 = vweird.f32 %v1091
  %vm1098 = vmor %vm1096, %vm1097
  %v1099 = vsel %vm1098, %v1091, %v1095
  %v1100 = vand.u32 2147483647, %v1089
  %vm1101 = vcmp.eq.f32.partialorder %v1100, 8.507059e+37
  %v1102 = vand.u32 %v1089, 2147483648
  %v1103 = vor.u32 1.1754944e-38, %v1102
  %v1104 = vsel %vm1101, %v1103, %v1099
  %v1105 = vmul.f32 1.0, %v1104
  %v1106 = vrcp.pop %v1090
  %v1107 = vmul.f32 %v1090, %v1106
  %v1108 = vsub.f32 1.0, %v1107
  %v1109 = vmul.f32 %v1106, %v1108
  %v1110 = vadd.f32 %v1106, %v1109
  %vm1111 = vweird.f32 %v1090
  %vm1112 = vweird.f32 %v1106
  %vm1113 = vmor %vm1111, %vm1112
  %v1114 = vsel %vm1113, %v1106, %v1110
  %v1115 = vand.u32 2147483647, %v1090
  %vm1116 = vcmp.eq.f32.partialorder %v1115, 8.507059e+37
  %v1117 = vand.u32 %v1090, 2147483648
  %v1118 = vor.u32 1.1754944e-38, %v1117
  %v1119 = vsel %vm1116, %v1118, %v1114
  %v1120 = vmul.f32 1.0, %v1119
  %v1121 = vtanh.pop %v1082
  %v1123 = vrot.slane %v1024, 6
  %v1125 = vmul.f32 %v1105, %v1123
  %1127 = vrot.lane.b32.xlu0 %v1121, 64
  %v1128 = vpop.permute.xlu0 %1127
  %v1130 = vmul.f32 %v1105, %v1128
  %1132 = vrot.lane.b32.xlu0 %v1130, 64
  %v1133 = vpop.permute.xlu0 %1132
  %v1135 = vadd.f32 %v1125, %v1133
  %v1136 = vtanh.pop %v1135
  %1138 = vrot.lane.b32.xlu0 %v1136, 64
  %v1139 = vpop.permute.xlu0 %1138
  %v1141 = vmul.f32 %v1120, %v1139
  %v1143 = vrot.slane %v1141, 4
  %v1144 = vsel %vm661, %v1143, 0
  %1146 = vmatpush.msra.mxu0 0.0
  %1147 = vmatpush.msra.mxu0 0.0
  %1148 = vmatpush.msra.mxu0 0.0
  %1149 = vmatpush.msra.mxu0 0.0
  %1150 = vmatpush.msra.mxu0 0.0
  %1151 = vmatpush.msra.mxu0 0.0
  %1152 = vmatpush.msra.mxu0 0.0
  %1153 = vmatpush.msra.mxu0 0.0
  %1154 = vmatpush.msra.mxu0 %v80
  %1155 = vmatpush.msra.mxu0 %v78
  %1156 = vmatpush.msra.mxu0 %v76
  %1157 = vmatpush.msra.mxu0 %v74
  %1158 = vmatpush.msra.mxu0 %v72
  %1159 = vmatpush.msra.mxu0 %v70
  %1160 = vmatpush.msra.mxu0 %v68
  %1161 = vmatpush.msra.mxu0 %v66
  %1162 = vmatmul.f32.gmra.mxu0 %v1144
  %v1163 = vpop.f32.mrf.mxu0
  %v1164 = vadd.f32 0.0, %v1163
  %1165 = vdwg.mxu0
  %1166 = vmatpush.msra.mxu0 0.0
  %1167 = vmatpush.msra.mxu0 0.0
  %1168 = vmatpush.msra.mxu0 0.0
  %1169 = vmatpush.msra.mxu0 0.0
  %1170 = vmatpush.msra.mxu0 0.0
  %1171 = vmatpush.msra.mxu0 0.0
  %1172 = vmatpush.msra.mxu0 0.0
  %1173 = vmatpush.msra.mxu0 0.0
  %1174 = vmatpush.msra.mxu0 %v81
  %1175 = vmatpush.msra.mxu0 %v79
  %1176 = vmatpush.msra.mxu0 %v77
  %1177 = vmatpush.msra.mxu0 %v75
  %1178 = vmatpush.msra.mxu0 %v73
  %1179 = vmatpush.msra.mxu0 %v71
  %1180 = vmatpush.msra.mxu0 %v69
  %1181 = vmatpush.msra.mxu0 %v67
  %1182 = vmatmul.f32.gmra.mxu0 %v1144
  %v1183 = vpop.f32.mrf.mxu0
  %v1184 = vadd.f32 0.0, %v1183
  %1185 = vdwg.mxu0
  %v1188 = vrot.slane %v1164, 2
  %v1189 = vrot.slane %v1184, 2
  %v1192 = vadd.f32 %v816, %v1188
  %v1193 = vadd.f32 %v817, %v1189
  %v1194 = vxor.u32 %v1192, 2147483648
  %v1195 = vxor.u32 %v1193, 2147483648
  %v1196 = vmul.f32 %v1194, 1.442695
  %v1197 = vpow.pop %v1196
  %v1198 = vmul.f32 %v1195, 1.442695
  %v1199 = vpow.pop %v1198
  %v1200 = vadd.f32 %v1197, 1.0
  %v1201 = vadd.f32 %v1199, 1.0
  %v1202 = vrcp.pop %v1200
  %v1203 = vmul.f32 %v1200, %v1202
  %v1204 = vsub.f32 1.0, %v1203
  %v1205 = vmul.f32 %v1202, %v1204
  %v1206 = vadd.f32 %v1202, %v1205
  %vm1207 = vweird.f32 %v1200
  %vm1208 = vweird.f32 %v1202
  %vm1209 = vmor %vm1207, %vm1208
  %v1210 = vsel %vm1209, %v1202, %v1206
  %v1211 = vand.u32 2147483647, %v1200
  %vm1212 = vcmp.eq.f32.partialorder %v1211, 8.507059e+37
  %v1213 = vand.u32 %v1200, 2147483648
  %v1214 = vor.u32 1.1754944e-38, %v1213
  %v1215 = vsel %vm1212, %v1214, %v1210
  %v1216 = vmul.f32 1.0, %v1215
  %v1217 = vrcp.pop %v1201
  %v1218 = vmul.f32 %v1201, %v1217
  %v1219 = vsub.f32 1.0, %v1218
  %v1220 = vmul.f32 %v1217, %v1219
  %v1221 = vadd.f32 %v1217, %v1220
  %vm1222 = vweird.f32 %v1201
  %vm1223 = vweird.f32 %v1217
  %vm1224 = vmor %vm1222, %vm1223
  %v1225 = vsel %vm1224, %v1217, %v1221
  %v1226 = vand.u32 2147483647, %v1201
  %vm1227 = vcmp.eq.f32.partialorder %v1226, 8.507059e+37
  %v1228 = vand.u32 %v1201, 2147483648
  %v1229 = vor.u32 1.1754944e-38, %v1228
  %v1230 = vsel %vm1227, %v1229, %v1225
  %v1231 = vmul.f32 1.0, %v1230
  %v1232 = vtanh.pop %v1193
  %v1234 = vrot.slane %v1135, 6
  %v1236 = vmul.f32 %v1216, %v1234
  %1238 = vrot.lane.b32.xlu0 %v1232, 64
  %v1239 = vpop.permute.xlu0 %1238
  %v1241 = vmul.f32 %v1216, %v1239
  %1243 = vrot.lane.b32.xlu0 %v1241, 64
  %v1244 = vpop.permute.xlu0 %1243
  %v1246 = vadd.f32 %v1236, %v1244
  %v1247 = vtanh.pop %v1246
  %1249 = vrot.lane.b32.xlu0 %v1247, 64
  %v1250 = vpop.permute.xlu0 %1249
  %v1252 = vmul.f32 %v1231, %v1250
  %v1254 = vrot.slane %v1252, 6
  %v1255 = vsel %vm661, %v1254, 0
  %1257 = vmatpush.msra.mxu0 0.0
  %1258 = vmatpush.msra.mxu0 0.0
  %1259 = vmatpush.msra.mxu0 0.0
  %1260 = vmatpush.msra.mxu0 0.0
  %1261 = vmatpush.msra.mxu0 0.0
  %1262 = vmatpush.msra.mxu0 0.0
  %1263 = vmatpush.msra.mxu0 0.0
  %1264 = vmatpush.msra.mxu0 0.0
  %1265 = vmatpush.msra.mxu0 %v80
  %1266 = vmatpush.msra.mxu0 %v78
  %1267 = vmatpush.msra.mxu0 %v76
  %1268 = vmatpush.msra.mxu0 %v74
  %1269 = vmatpush.msra.mxu0 %v72
  %1270 = vmatpush.msra.mxu0 %v70
  %1271 = vmatpush.msra.mxu0 %v68
  %1272 = vmatpush.msra.mxu0 %v66
  %1273 = vmatmul.f32.gmra.mxu0 %v1255
  %v1274 = vpop.f32.mrf.mxu0
  %v1275 = vadd.f32 0.0, %v1274
  %1276 = vdwg.mxu0
  %1277 = vmatpush.msra.mxu0 0.0
  %1278 = vmatpush.msra.mxu0 0.0
  %1279 = vmatpush.msra.mxu0 0.0
  %1280 = vmatpush.msra.mxu0 0.0
  %1281 = vmatpush.msra.mxu0 0.0
  %1282 = vmatpush.msra.mxu0 0.0
  %1283 = vmatpush.msra.mxu0 0.0
  %1284 = vmatpush.msra.mxu0 0.0
  %1285 = vmatpush.msra.mxu0 %v81
  %1286 = vmatpush.msra.mxu0 %v79
  %1287 = vmatpush.msra.mxu0 %v77
  %1288 = vmatpush.msra.mxu0 %v75
  %1289 = vmatpush.msra.mxu0 %v73
  %1290 = vmatpush.msra.mxu0 %v71
  %1291 = vmatpush.msra.mxu0 %v69
  %1292 = vmatpush.msra.mxu0 %v67
  %1293 = vmatmul.f32.gmra.mxu0 %v1255
  %v1294 = vpop.f32.mrf.mxu0
  %v1295 = vadd.f32 0.0, %v1294
  %1296 = vdwg.mxu0
  %v1297 = vadd.f32 %v818, %v1275
  %v1298 = vadd.f32 %v819, %v1295
  %v1299 = vxor.u32 %v1297, 2147483648
  %v1300 = vxor.u32 %v1298, 2147483648
  %v1301 = vmul.f32 %v1299, 1.442695
  %v1302 = vpow.pop %v1301
  %v1303 = vmul.f32 %v1300, 1.442695
  %v1304 = vpow.pop %v1303
  %v1305 = vadd.f32 %v1302, 1.0
  %v1306 = vadd.f32 %v1304, 1.0
  %v1307 = vrcp.pop %v1305
  %v1308 = vmul.f32 %v1305, %v1307
  %v1309 = vsub.f32 1.0, %v1308
  %v1310 = vmul.f32 %v1307, %v1309
  %v1311 = vadd.f32 %v1307, %v1310
  %vm1312 = vweird.f32 %v1305
  %vm1313 = vweird.f32 %v1307
  %vm1314 = vmor %vm1312, %vm1313
  %v1315 = vsel %vm1314, %v1307, %v1311
  %v1316 = vand.u32 2147483647, %v1305
  %vm1317 = vcmp.eq.f32.partialorder %v1316, 8.507059e+37
  %v1318 = vand.u32 %v1305, 2147483648
  %v1319 = vor.u32 1.1754944e-38, %v1318
  %v1320 = vsel %vm1317, %v1319, %v1315
  %v1321 = vmul.f32 1.0, %v1320
  %v1322 = vrcp.pop %v1306
  %v1323 = vmul.f32 %v1306, %v1322
  %v1324 = vsub.f32 1.0, %v1323
  %v1325 = vmul.f32 %v1322, %v1324
  %v1326 = vadd.f32 %v1322, %v1325
  %vm1327 = vweird.f32 %v1306
  %vm1328 = vweird.f32 %v1322
  %vm1329 = vmor %vm1327, %vm1328
  %v1330 = vsel %vm1329, %v1322, %v1326
  %v1331 = vand.u32 2147483647, %v1306
  %vm1332 = vcmp.eq.f32.partialorder %v1331, 8.507059e+37
  %v1333 = vand.u32 %v1306, 2147483648
  %v1334 = vor.u32 1.1754944e-38, %v1333
  %v1335 = vsel %vm1332, %v1334, %v1330
  %v1336 = vmul.f32 1.0, %v1335
  %v1337 = vtanh.pop %v1298
  %v1339 = vrot.slane %v1246, 6
  %v1341 = vmul.f32 %v1321, %v1339
  %1343 = vrot.lane.b32.xlu0 %v1337, 64
  %v1344 = vpop.permute.xlu0 %1343
  %v1346 = vmul.f32 %v1321, %v1344
  %1348 = vrot.lane.b32.xlu0 %v1346, 64
  %v1349 = vpop.permute.xlu0 %1348
  %v1351 = vadd.f32 %v1341, %v1349
  %v1352 = vtanh.pop %v1351
  %1354 = vrot.lane.b32.xlu0 %v1352, 64
  %v1355 = vpop.permute.xlu0 %1354
  %v1357 = vmul.f32 %v1336, %v1355
  %v1359 = vsel %vm661, %v1357, 0
  %1361 = vmatpush.msra.mxu0 0.0
  %1362 = vmatpush.msra.mxu0 0.0
  %1363 = vmatpush.msra.mxu0 0.0
  %1364 = vmatpush.msra.mxu0 0.0
  %1365 = vmatpush.msra.mxu0 0.0
  %1366 = vmatpush.msra.mxu0 0.0
  %1367 = vmatpush.msra.mxu0 0.0
  %1368 = vmatpush.msra.mxu0 0.0
  %1369 = vmatpush.msra.mxu0 %v80
  %1370 = vmatpush.msra.mxu0 %v78
  %1371 = vmatpush.msra.mxu0 %v76
  %1372 = vmatpush.msra.mxu0 %v74
  %1373 = vmatpush.msra.mxu0 %v72
  %1374 = vmatpush.msra.mxu0 %v70
  %1375 = vmatpush.msra.mxu0 %v68
  %1376 = vmatpush.msra.mxu0 %v66
  %1377 = vmatmul.f32.gmra.mxu0 %v1359
  %v1378 = vpop.f32.mrf.mxu0
  %v1379 = vadd.f32 0.0, %v1378
  %1380 = vdwg.mxu0
  %1381 = vmatpush.msra.mxu0 0.0
  %1382 = vmatpush.msra.mxu0 0.0
  %1383 = vmatpush.msra.mxu0 0.0
  %1384 = vmatpush.msra.mxu0 0.0
  %1385 = vmatpush.msra.mxu0 0.0
  %1386 = vmatpush.msra.mxu0 0.0
  %1387 = vmatpush.msra.mxu0 0.0
  %1388 = vmatpush.msra.mxu0 0.0
  %1389 = vmatpush.msra.mxu0 %v81
  %1390 = vmatpush.msra.mxu0 %v79
  %1391 = vmatpush.msra.mxu0 %v77
  %1392 = vmatpush.msra.mxu0 %v75
  %1393 = vmatpush.msra.mxu0 %v73
  %1394 = vmatpush.msra.mxu0 %v71
  %1395 = vmatpush.msra.mxu0 %v69
  %1396 = vmatpush.msra.mxu0 %v67
  %1397 = vmatmul.f32.gmra.mxu0 %v1359
  %v1398 = vpop.f32.mrf.mxu0
  %v1399 = vadd.f32 0.0, %v1398
  %1400 = vdwg.mxu0
  %v1403 = vrot.slane %v1379, 6
  %v1404 = vrot.slane %v1399, 6
  %v1407 = vadd.f32 %v818, %v1403
  %v1408 = vadd.f32 %v819, %v1404
  %v1409 = vxor.u32 %v1407, 2147483648
  %v1410 = vxor.u32 %v1408, 2147483648
  %v1411 = vmul.f32 %v1409, 1.442695
  %v1412 = vpow.pop %v1411
  %v1413 = vmul.f32 %v1410, 1.442695
  %v1414 = vpow.pop %v1413
  %v1415 = vadd.f32 %v1412, 1.0
  %v1416 = vadd.f32 %v1414, 1.0
  %v1417 = vrcp.pop %v1415
  %v1418 = vmul.f32 %v1415, %v1417
  %v1419 = vsub.f32 1.0, %v1418
  %v1420 = vmul.f32 %v1417, %v1419
  %v1421 = vadd.f32 %v1417, %v1420
  %vm1422 = vweird.f32 %v1415
  %vm1423 = vweird.f32 %v1417
  %vm1424 = vmor %vm1422, %vm1423
  %v1425 = vsel %vm1424, %v1417, %v1421
  %v1426 = vand.u32 2147483647, %v1415
  %vm1427 = vcmp.eq.f32.partialorder %v1426, 8.507059e+37
  %v1428 = vand.u32 %v1415, 2147483648
  %v1429 = vor.u32 1.1754944e-38, %v1428
  %v1430 = vsel %vm1427, %v1429, %v1425
  %v1431 = vmul.f32 1.0, %v1430
  %v1432 = vrcp.pop %v1416
  %v1433 = vmul.f32 %v1416, %v1432
  %v1434 = vsub.f32 1.0, %v1433
  %v1435 = vmul.f32 %v1432, %v1434
  %v1436 = vadd.f32 %v1432, %v1435
  %vm1437 = vweird.f32 %v1416
  %vm1438 = vweird.f32 %v1432
  %vm1439 = vmor %vm1437, %vm1438
  %v1440 = vsel %vm1439, %v1432, %v1436
  %v1441 = vand.u32 2147483647, %v1416
  %vm1442 = vcmp.eq.f32.partialorder %v1441, 8.507059e+37
  %v1443 = vand.u32 %v1416, 2147483648
  %v1444 = vor.u32 1.1754944e-38, %v1443
  %v1445 = vsel %vm1442, %v1444, %v1440
  %v1446 = vmul.f32 1.0, %v1445
  %v1447 = vtanh.pop %v1408
  %v1449 = vrot.slane %v1351, 6
  %v1451 = vmul.f32 %v1431, %v1449
  %1453 = vrot.lane.b32.xlu0 %v1447, 64
  %v1454 = vpop.permute.xlu0 %1453
  %v1456 = vmul.f32 %v1431, %v1454
  %1458 = vrot.lane.b32.xlu0 %v1456, 64
  %v1459 = vpop.permute.xlu0 %1458
  %v1461 = vadd.f32 %v1451, %v1459
  %v1462 = vtanh.pop %v1461
  %1464 = vrot.lane.b32.xlu0 %v1462, 64
  %v1465 = vpop.permute.xlu0 %1464
  %v1467 = vmul.f32 %v1446, %v1465
  %v1469 = vrot.slane %v1467, 2
  %v1470 = vsel %vm661, %v1469, 0
  %1472 = vmatpush.msra.mxu0 0.0
  %1473 = vmatpush.msra.mxu0 0.0
  %1474 = vmatpush.msra.mxu0 0.0
  %1475 = vmatpush.msra.mxu0 0.0
  %1476 = vmatpush.msra.mxu0 0.0
  %1477 = vmatpush.msra.mxu0 0.0
  %1478 = vmatpush.msra.mxu0 0.0
  %1479 = vmatpush.msra.mxu0 0.0
  %1480 = vmatpush.msra.mxu0 %v80
  %1481 = vmatpush.msra.mxu0 %v78
  %1482 = vmatpush.msra.mxu0 %v76
  %1483 = vmatpush.msra.mxu0 %v74
  %1484 = vmatpush.msra.mxu0 %v72
  %1485 = vmatpush.msra.mxu0 %v70
  %1486 = vmatpush.msra.mxu0 %v68
  %1487 = vmatpush.msra.mxu0 %v66
  %1488 = vmatmul.f32.gmra.mxu0 %v1470
  %v1489 = vpop.f32.mrf.mxu0
  %v1490 = vadd.f32 0.0, %v1489
  %1491 = vdwg.mxu0
  %1492 = vmatpush.msra.mxu0 0.0
  %1493 = vmatpush.msra.mxu0 0.0
  %1494 = vmatpush.msra.mxu0 0.0
  %1495 = vmatpush.msra.mxu0 0.0
  %1496 = vmatpush.msra.mxu0 0.0
  %1497 = vmatpush.msra.mxu0 0.0
  %1498 = vmatpush.msra.mxu0 0.0
  %1499 = vmatpush.msra.mxu0 0.0
  %1500 = vmatpush.msra.mxu0 %v81
  %1501 = vmatpush.msra.mxu0 %v79
  %1502 = vmatpush.msra.mxu0 %v77
  %1503 = vmatpush.msra.mxu0 %v75
  %1504 = vmatpush.msra.mxu0 %v73
  %1505 = vmatpush.msra.mxu0 %v71
  %1506 = vmatpush.msra.mxu0 %v69
  %1507 = vmatpush.msra.mxu0 %v67
  %1508 = vmatmul.f32.gmra.mxu0 %v1470
  %v1509 = vpop.f32.mrf.mxu0
  %v1510 = vadd.f32 0.0, %v1509
  %1511 = vdwg.mxu0
  %v1514 = vrot.slane %v1490, 4
  %v1515 = vrot.slane %v1510, 4
  %v1518 = vadd.f32 %v818, %v1514
  %v1519 = vadd.f32 %v819, %v1515
  %v1520 = vxor.u32 %v1518, 2147483648
  %v1521 = vxor.u32 %v1519, 2147483648
  %v1522 = vmul.f32 %v1520, 1.442695
  %v1523 = vpow.pop %v1522
  %v1524 = vmul.f32 %v1521, 1.442695
  %v1525 = vpow.pop %v1524
  %v1526 = vadd.f32 %v1523, 1.0
  %v1527 = vadd.f32 %v1525, 1.0
  %v1528 = vrcp.pop %v1526
  %v1529 = vmul.f32 %v1526, %v1528
  %v1530 = vsub.f32 1.0, %v1529
  %v1531 = vmul.f32 %v1528, %v1530
  %v1532 = vadd.f32 %v1528, %v1531
  %vm1533 = vweird.f32 %v1526
  %vm1534 = vweird.f32 %v1528
  %vm1535 = vmor %vm1533, %vm1534
  %v1536 = vsel %vm1535, %v1528, %v1532
  %v1537 = vand.u32 2147483647, %v1526
  %vm1538 = vcmp.eq.f32.partialorder %v1537, 8.507059e+37
  %v1539 = vand.u32 %v1526, 2147483648
  %v1540 = vor.u32 1.1754944e-38, %v1539
  %v1541 = vsel %vm1538, %v1540, %v1536
  %v1542 = vmul.f32 1.0, %v1541
  %v1543 = vrcp.pop %v1527
  %v1544 = vmul.f32 %v1527, %v1543
  %v1545 = vsub.f32 1.0, %v1544
  %v1546 = vmul.f32 %v1543, %v1545
  %v1547 = vadd.f32 %v1543, %v1546
  %vm1548 = vweird.f32 %v1527
  %vm1549 = vweird.f32 %v1543
  %vm1550 = vmor %vm1548, %vm1549
  %v1551 = vsel %vm1550, %v1543, %v1547
  %v1552 = vand.u32 2147483647, %v1527
  %vm1553 = vcmp.eq.f32.partialorder %v1552, 8.507059e+37
  %v1554 = vand.u32 %v1527, 2147483648
  %v1555 = vor.u32 1.1754944e-38, %v1554
  %v1556 = vsel %vm1553, %v1555, %v1551
  %v1557 = vmul.f32 1.0, %v1556
  %v1558 = vtanh.pop %v1519
  %v1560 = vrot.slane %v1461, 6
  %v1562 = vmul.f32 %v1542, %v1560
  %1564 = vrot.lane.b32.xlu0 %v1558, 64
  %v1565 = vpop.permute.xlu0 %1564
  %v1567 = vmul.f32 %v1542, %v1565
  %1569 = vrot.lane.b32.xlu0 %v1567, 64
  %v1570 = vpop.permute.xlu0 %1569
  %v1572 = vadd.f32 %v1562, %v1570
  %v1573 = vtanh.pop %v1572
  %1575 = vrot.lane.b32.xlu0 %v1573, 64
  %v1576 = vpop.permute.xlu0 %1575
  %v1578 = vmul.f32 %v1557, %v1576
  %v1580 = vrot.slane %v1578, 4
  %v1581 = vsel %vm661, %v1580, 0
  %1583 = vmatpush.msra.mxu0 0.0
  %1584 = vmatpush.msra.mxu0 0.0
  %1585 = vmatpush.msra.mxu0 0.0
  %1586 = vmatpush.msra.mxu0 0.0
  %1587 = vmatpush.msra.mxu0 0.0
  %1588 = vmatpush.msra.mxu0 0.0
  %1589 = vmatpush.msra.mxu0 0.0
  %1590 = vmatpush.msra.mxu0 0.0
  %1591 = vmatpush.msra.mxu0 %v80
  %1592 = vmatpush.msra.mxu0 %v78
  %1593 = vmatpush.msra.mxu0 %v76
  %1594 = vmatpush.msra.mxu0 %v74
  %1595 = vmatpush.msra.mxu0 %v72
  %1596 = vmatpush.msra.mxu0 %v70
  %1597 = vmatpush.msra.mxu0 %v68
  %1598 = vmatpush.msra.mxu0 %v66
  %1599 = vmatmul.f32.gmra.mxu0 %v1581
  %v1600 = vpop.f32.mrf.mxu0
  %v1601 = vadd.f32 0.0, %v1600
  %1602 = vdwg.mxu0
  %1603 = vmatpush.msra.mxu0 0.0
  %1604 = vmatpush.msra.mxu0 0.0
  %1605 = vmatpush.msra.mxu0 0.0
  %1606 = vmatpush.msra.mxu0 0.0
  %1607 = vmatpush.msra.mxu0 0.0
  %1608 = vmatpush.msra.mxu0 0.0
  %1609 = vmatpush.msra.mxu0 0.0
  %1610 = vmatpush.msra.mxu0 0.0
  %1611 = vmatpush.msra.mxu0 %v81
  %1612 = vmatpush.msra.mxu0 %v79
  %1613 = vmatpush.msra.mxu0 %v77
  %1614 = vmatpush.msra.mxu0 %v75
  %1615 = vmatpush.msra.mxu0 %v73
  %1616 = vmatpush.msra.mxu0 %v71
  %1617 = vmatpush.msra.mxu0 %v69
  %1618 = vmatpush.msra.mxu0 %v67
  %1619 = vmatmul.f32.gmra.mxu0 %v1581
  %v1620 = vpop.f32.mrf.mxu0
  %v1621 = vadd.f32 0.0, %v1620
  %1622 = vdwg.mxu0
  %v1625 = vrot.slane %v1601, 2
  %v1626 = vrot.slane %v1621, 2
  %v1629 = vadd.f32 %v818, %v1625
  %v1630 = vadd.f32 %v819, %v1626
  %v1631 = vxor.u32 %v1629, 2147483648
  %v1632 = vxor.u32 %v1630, 2147483648
  %v1633 = vmul.f32 %v1631, 1.442695
  %v1634 = vpow.pop %v1633
  %v1635 = vmul.f32 %v1632, 1.442695
  %v1636 = vpow.pop %v1635
  %v1637 = vadd.f32 %v1634, 1.0
  %v1638 = vadd.f32 %v1636, 1.0
  %v1639 = vrcp.pop %v1637
  %v1640 = vmul.f32 %v1637, %v1639
  %v1641 = vsub.f32 1.0, %v1640
  %v1642 = vmul.f32 %v1639, %v1641
  %v1643 = vadd.f32 %v1639, %v1642
  %vm1644 = vweird.f32 %v1637
  %vm1645 = vweird.f32 %v1639
  %vm1646 = vmor %vm1644, %vm1645
  %v1647 = vsel %vm1646, %v1639, %v1643
  %v1648 = vand.u32 2147483647, %v1637
  %vm1649 = vcmp.eq.f32.partialorder %v1648, 8.507059e+37
  %v1650 = vand.u32 %v1637, 2147483648
  %v1651 = vor.u32 1.1754944e-38, %v1650
  %v1652 = vsel %vm1649, %v1651, %v1647
  %v1653 = vmul.f32 1.0, %v1652
  %v1654 = vrcp.pop %v1638
  %v1655 = vmul.f32 %v1638, %v1654
  %v1656 = vsub.f32 1.0, %v1655
  %v1657 = vmul.f32 %v1654, %v1656
  %v1658 = vadd.f32 %v1654, %v1657
  %vm1659 = vweird.f32 %v1638
  %vm1660 = vweird.f32 %v1654
  %vm1661 = vmor %vm1659, %vm1660
  %v1662 = vsel %vm1661, %v1654, %v1658
  %v1663 = vand.u32 2147483647, %v1638
  %vm1664 = vcmp.eq.f32.partialorder %v1663, 8.507059e+37
  %v1665 = vand.u32 %v1638, 2147483648
  %v1666 = vor.u32 1.1754944e-38, %v1665
  %v1667 = vsel %vm1664, %v1666, %v1662
  %v1668 = vmul.f32 1.0, %v1667
  %v1669 = vtanh.pop %v1630
  %v1671 = vrot.slane %v1572, 6
  %v1673 = vmul.f32 %v1653, %v1671
  %1675 = vrot.lane.b32.xlu0 %v1669, 64
  %v1676 = vpop.permute.xlu0 %1675
  %v1678 = vmul.f32 %v1653, %v1676
  %1680 = vrot.lane.b32.xlu0 %v1678, 64
  %v1681 = vpop.permute.xlu0 %1680
  %v1683 = vadd.f32 %v1673, %v1681
  %v1684 = vtanh.pop %v1683
  %1686 = vrot.lane.b32.xlu0 %v1684, 64
  %v1687 = vpop.permute.xlu0 %1686
  %v1689 = vmul.f32 %v1668, %v1687
  %1691 = vrot.lane.b32.xlu0 %v1689, 96
  %v1692 = vpop.permute.xlu0 %1691
  %v1694 = vadd.f32 %v1689, %v1692
  %v1696 = vrot.slane %v1694, 6
  %v1697 = vsel %vm86, %v1696, 0
  %1699 = vmatpush.msra.mxu0 0.0
  %1700 = vmatpush.msra.mxu0 0.0
  %1701 = vmatpush.msra.mxu0 0.0
  %1702 = vmatpush.msra.mxu0 0.0
  %1703 = vmatpush.msra.mxu0 0.0
  %1704 = vmatpush.msra.mxu0 0.0
  %1705 = vmatpush.msra.mxu0 0.0
  %1706 = vmatpush.msra.mxu0 0.0
  %1707 = vmatpush.msra.mxu0 0.0
  %1708 = vmatpush.msra.mxu0 0.0
  %1709 = vmatpush.msra.mxu0 0.0
  %1710 = vmatpush.msra.mxu0 0.0
  %1711 = vmatpush.msra.mxu0 %v29
  %1712 = vmatpush.msra.mxu0 %v28
  %1713 = vmatpush.msra.mxu0 %v27
  %1714 = vmatpush.msra.mxu0 %v26
  %1715 = vmatmul.f32.gmra.mxu0 %v1697
  %v1716 = vpop.f32.mrf.mxu0
  %v1717 = vadd.f32 %v49, %v1716
  %1718 = vdwg.mxu0
  %v1719 = vmax.f32 %v1717, 0.0
  %1720 = vrot.lane.b32.xlu0 %v48, 32
  %v1721 = vpop.permute.xlu0 %1720
  %v1724 = vsel %vm661, %v1719, 0
  %1726 = vmatpush.msra.mxu0 0.0
  %1727 = vmatpush.msra.mxu0 0.0
  %1728 = vmatpush.msra.mxu0 0.0
  %1729 = vmatpush.msra.mxu0 0.0
  %1730 = vmatpush.msra.mxu0 0.0
  %1731 = vmatpush.msra.mxu0 0.0
  %1732 = vmatpush.msra.mxu0 0.0
  %1733 = vmatpush.msra.mxu0 0.0
  %1734 = vmatpush.msra.mxu0 %v45
  %1735 = vmatpush.msra.mxu0 %v44
  %1736 = vmatpush.msra.mxu0 %v43
  %1737 = vmatpush.msra.mxu0 %v42
  %1738 = vmatpush.msra.mxu0 %v41
  %1739 = vmatpush.msra.mxu0 %v40
  %1740 = vmatpush.msra.mxu0 %v39
  %1741 = vmatpush.msra.mxu0 %v38
  %1742 = vmatmul.f32.gmra.mxu0 %v1724
  %v1743 = vpop.f32.mrf.mxu0
  %v1744 = vadd.f32 %v1721, %v1743
  %1745 = vdwg.mxu0
  %v1746 = vxor.u32 %v1744, 2147483648
  %v1747 = vmul.f32 %v1746, 1.442695
  %v1748 = vpow.pop %v1747
  %v1749 = vadd.f32 %v1748, 1.0
  %v1750 = vrcp.pop %v1749
  %v1751 = vmul.f32 %v1749, %v1750
  %v1752 = vsub.f32 1.0, %v1751
  %v1753 = vmul.f32 %v1750, %v1752
  %v1754 = vadd.f32 %v1750, %v1753
  %vm1755 = vweird.f32 %v1749
  %vm1756 = vweird.f32 %v1750
  %vm1757 = vmor %vm1755, %vm1756
  %v1758 = vsel %vm1757, %v1750, %v1754
  %v1759 = vand.u32 2147483647, %v1749
  %vm1760 = vcmp.eq.f32.partialorder %v1759, 8.507059e+37
  %v1761 = vand.u32 %v1749, 2147483648
  %v1762 = vor.u32 1.1754944e-38, %v1761
  %v1763 = vsel %vm1760, %v1762, %v1758
  %v1764 = vmul.f32 1.0, %v1763
  %vm1765 = vcmask 1024
  %1766 = vst.msk [vmem:[%s3] sm:$0x3] %vm1765, %v1764
  // Predicated region
  $region14: #{model_forward.1} parent=0 // pred_check
    _
  $region15: #{model_forward.1} parent=0 // pred_check_branch
    %1768 = sbr.rel (0) target = $region17
  $region16: #{model_forward.1} parent=0 // pred_region
    _
  $region17: #{model_forward.1} parent=0 // pred_fallthru
    _
  // Predicated region
  $region18: #{model_forward.1} parent=0 // pred_check
    _
  $region19: #{model_forward.1} parent=0 // pred_check_branch
    %1770 = sbr.rel (0) target = $region21
  $region20: #{model_forward.1} parent=0 // pred_region
    _
  $region21: #{model_forward.1} parent=0 // pred_fallthru
    _

</llo_original>
